<compile_context>
chip_gen: v7x
topology: tpu7x:2x2x1
jax: 0.10.0
libtpu: 0.0.40
codegen_flags: <defaults>
</compile_context>

<pallas_src>
import functools

import jax
import jax.numpy as jnp
from jax import lax
from jax.experimental import pallas as pl
from jax.experimental.pallas import tpu as pltpu


def _round_up(n, m):
    return ((n + m - 1) // m) * m


def _cdiv(a, b):
    return (a + b - 1) // b


def _vmem_capacity_bytes():
    """Physical per-core VMEM, with a conservative fallback."""
    try:
        return int(pltpu.get_tpu_info().vmem_capacity_bytes)
    except Exception:
        return 64 * 1024 * 1024  # assume the smallest (v7x-like) part


def _mlp_kernel(num_hidden, precision, *refs):
    """Fused MLP kernel.

    refs = (x_ref, w_0, b_0, w_1, b_1, ..., w_out, b_out, o_ref)
    ReLU after each of the first `num_hidden` linear layers, none after the
    final ("out") layer.  Dots take operands in their native (possibly bf16)
    dtype and accumulate in f32; bias-add + ReLU stay f32.
    """
    x_ref = refs[0]
    o_ref = refs[-1]
    params = refs[1:-1]            # interleaved (w, b) pairs

    h = x_ref[...]                 # MXU-native operand dtype
    total = num_hidden + 1
    for li in range(total):
        w = params[2 * li][...]
        b = params[2 * li + 1][...]              # (1, out_pad), already f32
        acc = jnp.dot(h, w, preferred_element_type=jnp.float32,
                      precision=precision)
        acc = acc + b                            # f32 bias-add (VPU, free under MXU)
        if li < num_hidden:
            acc = jnp.maximum(acc, 0.0)          # ReLU (hidden layers only)
            h = acc.astype(w.dtype)              # back to MXU-native dtype
        else:
            h = acc
    o_ref[...] = h.astype(o_ref.dtype)


def mlp_forward(x, weights, biases, *, tm=256, operand_dtype=None,
                precision=None):
    """Run the fused MLP Pallas kernel.

    x:              (B, in_dim) array (f32 or bf16)
    weights:        list of (in_i, out_i) arrays (already transposed from PyTorch)
    biases:         list of (out_i,) arrays
    operand_dtype:  dtype fed to the MXU (weights + activations).  Defaults to
                    x.dtype; pass jnp.bfloat16 for the fast-operand path
                    (accumulation stays f32).
    precision:      matmul precision; defaults to HIGHEST for f32 operands.
    """
    num_hidden = len(weights) - 1
    B, in_dim = x.shape
    out_dim = weights[-1].shape[1]
    out_dtype = x.dtype

    op_dtype = jnp.dtype(operand_dtype) if operand_dtype is not None else jnp.dtype(x.dtype)
    if precision is None and op_dtype == jnp.float32:
        precision = lax.Precision.HIGHEST  # fp32-Linear parity for the exact path

    # ---- feature dims: keep the first (contraction) dim unpadded; pad every
    #      layer-output dim to a multiple of 128 lanes (exact: zeros) ----
    dims = [in_dim] + [w.shape[1] for w in weights]
    dims_p = [in_dim] + [_round_up(d, 128) for d in dims[1:]]

    flat_params = []
    for li, (w, b) in enumerate(zip(weights, biases)):
        ip, op = dims_p[li], dims_p[li + 1]
        wp = jnp.zeros((ip, op), op_dtype)
        wp = wp.at[: w.shape[0], : w.shape[1]].set(w.astype(op_dtype))
        bp = jnp.zeros((1, op), jnp.float32)
        bp = bp.at[0, : b.shape[0]].set(b.astype(jnp.float32))
        flat_params += [wp, bp]

    # ---- batch tile: multiple of 16 for 2-byte operands (sublane packing),
    #      8 for f32; ensure >=2 grid steps when possible (v7x megacore) ----
    min_m = max(8, 32 // op_dtype.itemsize)
    tm = max(min_m, min(int(tm), _round_up(B, min_m)))
    tm = _round_up(tm, min_m)
    b_pad = _round_up(B, tm)
    if b_pad // tm == 1 and b_pad >= 2 * min_m:
        tm = _round_up(_cdiv(B, 2), min_m)
        b_pad = _round_up(B, tm)

    xp = jnp.zeros((b_pad, in_dim), op_dtype).at[:B, :].set(x.astype(op_dtype))

    grid = (b_pad // tm,)

    # ---- BlockSpecs: stream x/out (double-buffered), weights/biases are
    #      VMEM-resident and single-buffered (constant block index) ----
    in_specs = [pl.BlockSpec((tm, in_dim), lambda i: (i, 0))]
    for li in range(num_hidden + 1):
        ip, op = dims_p[li], dims_p[li + 1]
        in_specs.append(
            pl.BlockSpec((ip, op), lambda i: (0, 0), pipeline_mode=pl.Buffered(1)))
        in_specs.append(
            pl.BlockSpec((1, op), lambda i: (0, 0), pipeline_mode=pl.Buffered(1)))
    out_specs = pl.BlockSpec((tm, dims_p[-1]), lambda i: (i, 0))

    # ---- VMEM budget: single-buffered params + double-buffered x/out tiles
    #      + f32 activation live set; cap at physical VMEM minus headroom ----
    param_bytes = sum(int(p.size) * p.dtype.itemsize for p in flat_params)
    io_bytes = 2 * tm * (in_dim * op_dtype.itemsize
                         + dims_p[-1] * jnp.dtype(out_dtype).itemsize)
    act_bytes = 2 * tm * max(dims_p) * 4        # f32 accumulators
    vmem_need = param_bytes + io_bytes + act_bytes
    vmem_cap = max(32 * 1024 * 1024, _vmem_capacity_bytes() - 16 * 1024 * 1024)
    vmem_limit = int(min(max(int(1.5 * vmem_need), 32 * 1024 * 1024), vmem_cap))

    flops = 2 * b_pad * sum(dims_p[i] * dims_p[i + 1] for i in range(len(dims_p) - 1))
    bytes_accessed = (
        param_bytes
        + b_pad * in_dim * op_dtype.itemsize
        + b_pad * dims_p[-1] * jnp.dtype(out_dtype).itemsize
    )

    kernel = functools.partial(_mlp_kernel, num_hidden, precision)

    out_padded = pl.pallas_call(
        kernel,
        out_shape=jax.ShapeDtypeStruct((b_pad, dims_p[-1]), out_dtype),
        grid=grid,
        in_specs=in_specs,
        out_specs=out_specs,
        compiler_params=pltpu.CompilerParams(
            dimension_semantics=("parallel",),
            vmem_limit_bytes=vmem_limit,
        ),
        cost_estimate=pl.CostEstimate(
            flops=flops, transcendentals=0, bytes_accessed=bytes_accessed
        ),
    )(xp, *flat_params)

    return out_padded[:B, :out_dim]


def init_mlp_params(key, in_shape, out_shape, layer_sizes):
    """Deterministic init matching nn.Linear conventions.

    Returns weights already transposed to (in, out) for the kernel.
    """
    dims = [in_shape] + list(layer_sizes) + [out_shape]
    weights, biases = [], []
    for i in range(len(dims) - 1):
        fan_in, fan_out = dims[i], dims[i + 1]
        key, wk, bk = jax.random.split(key, 3)
        bound = 1.0 / jnp.sqrt(fan_in)
        w = jax.random.uniform(wk, (fan_in, fan_out), jnp.float32, -bound, bound)
        b = jax.random.uniform(bk, (fan_out,), jnp.float32, -bound, bound)
        weights.append(w)
        biases.append(b)
    return weights, biases


def mlp_reference(x, weights, biases):
    """Pure-JAX reference identical to the PyTorch forward."""
    num_hidden = len(weights) - 1
    for i, (w, b) in enumerate(zip(weights, biases)):
        x = x @ w + b
        if i < num_hidden:
            x = jnp.maximum(x, 0.0)
    return x


if __name__ == "__main__":
    # Small shapes consistent with MLP(in_shape, out_shape, layer_sizes).
    in_shape, out_shape = 16, 8
    layer_sizes = [32, 32]
    batch = 8

    key = jax.random.PRNGKey(0)
    key, xk = jax.random.split(key)
    x = jax.random.normal(xk, (batch, in_shape), jnp.float32)

    weights, biases = init_mlp_params(key, in_shape, out_shape, layer_sizes)
    ref = mlp_reference(x, weights, biases)

    # Exact (f32-operand, HIGHEST precision) path.
    out = jax.block_until_ready(mlp_forward(x, weights, biases))
    assert out.shape == (batch, out_shape), out.shape
    assert jnp.allclose(out, ref, atol=1e-5, rtol=1e-5), (
        f"max abs err = {jnp.max(jnp.abs(out - ref))}"
    )

    # Fast bf16-operand / f32-accumulate path (loose tolerance vs f32 ref).
    out_bf16 = jax.block_until_ready(
        mlp_forward(x, weights, biases, operand_dtype=jnp.bfloat16))
    assert out_bf16.shape == (batch, out_shape), out_bf16.shape
    assert jnp.allclose(out_bf16, ref, atol=0.15, rtol=0.1), (
        f"max abs err (bf16 operands) = {jnp.max(jnp.abs(out_bf16 - ref))}"
    )

    print("KERNEL_OK")
</pallas_src>

<mosaic_0001>
module attributes {stable_mosaic.version = 11 : i64} {
  func.func @_mlp_kernel(%arg0: i32, %arg1: memref<8x16xf32, #tpu.memory_space<vmem>>, %arg2: memref<16x128xf32, #tpu.memory_space<vmem>>, %arg3: memref<1x128xf32, #tpu.memory_space<vmem>>, %arg4: memref<128x128xf32, #tpu.memory_space<vmem>>, %arg5: memref<1x128xf32, #tpu.memory_space<vmem>>, %arg6: memref<128x128xf32, #tpu.memory_space<vmem>>, %arg7: memref<1x128xf32, #tpu.memory_space<vmem>>, %arg8: memref<8x128xf32, #tpu.memory_space<vmem>>) attributes {dimension_semantics = [#tpu.dimension_semantics<parallel>], iteration_bounds = array<i64: 1>, scalar_prefetch = 0 : i64, scratch_operands = 0 : i64, tpu.core_type = #tpu.core_type<tc>, window_params = [{transform_indices = @transform_0, window_bounds = array<i64: 8, 16>}, {pipeline_mode = #tpu.pipeline_mode<synchronous>, transform_indices = @transform_1, window_bounds = array<i64: 16, 128>}, {pipeline_mode = #tpu.pipeline_mode<synchronous>, transform_indices = @transform_2, window_bounds = array<i64: 1, 128>}, {pipeline_mode = #tpu.pipeline_mode<synchronous>, transform_indices = @transform_3, window_bounds = array<i64: 128, 128>}, {pipeline_mode = #tpu.pipeline_mode<synchronous>, transform_indices = @transform_4, window_bounds = array<i64: 1, 128>}, {pipeline_mode = #tpu.pipeline_mode<synchronous>, transform_indices = @transform_5, window_bounds = array<i64: 128, 128>}, {pipeline_mode = #tpu.pipeline_mode<synchronous>, transform_indices = @transform_6, window_bounds = array<i64: 1, 128>}, {transform_indices = @transform_7, window_bounds = array<i64: 8, 128>}]} {
    %c0 = arith.constant 0 : index
    %c0_0 = arith.constant 0 : index
    %0 = vector.load %arg1[%c0, %c0_0] : memref<8x16xf32, #tpu.memory_space<vmem>>, vector<8x16xf32>
    %c0_1 = arith.constant 0 : index
    %c0_2 = arith.constant 0 : index
    %1 = vector.load %arg2[%c0_1, %c0_2] : memref<16x128xf32, #tpu.memory_space<vmem>>, vector<16x128xf32>
    %c0_3 = arith.constant 0 : index
    %c0_4 = arith.constant 0 : index
    %2 = vector.load %arg3[%c0_3, %c0_4] : memref<1x128xf32, #tpu.memory_space<vmem>>, vector<1x128xf32>
    %cst = arith.constant dense<0.000000e+00> : vector<8x128xf32>
    %3 = tpu.matmul %0, %1, %cst {dimension_numbers = #tpu.dot_dimension_numbers<[1], [0], [0], [1], [0, 0, 1, 1], [], []>, precision = #tpu.contract_precision<fp32>} : vector<8x16xf32>, vector<16x128xf32>, vector<8x128xf32> -> vector<8x128xf32>
    %4 = vector.broadcast %2 : vector<1x128xf32> to vector<8x128xf32>
    %5 = arith.addf %3, %4 : vector<8x128xf32>
    %cst_5 = arith.constant 0.000000e+00 : f32
    %6 = vector.broadcast %cst_5 : f32 to vector<8x128xf32>
    %7 = arith.maximumf %5, %6 : vector<8x128xf32>
    %c0_6 = arith.constant 0 : index
    %c0_7 = arith.constant 0 : index
    %8 = vector.load %arg4[%c0_6, %c0_7] : memref<128x128xf32, #tpu.memory_space<vmem>>, vector<128x128xf32>
    %c0_8 = arith.constant 0 : index
    %c0_9 = arith.constant 0 : index
    %9 = vector.load %arg5[%c0_8, %c0_9] : memref<1x128xf32, #tpu.memory_space<vmem>>, vector<1x128xf32>
    %cst_10 = arith.constant dense<0.000000e+00> : vector<8x128xf32>
    %10 = tpu.matmul %7, %8, %cst_10 {dimension_numbers = #tpu.dot_dimension_numbers<[1], [0], [0], [1], [0, 0, 1, 1], [], []>, precision = #tpu.contract_precision<fp32>} : vector<8x128xf32>, vector<128x128xf32>, vector<8x128xf32> -> vector<8x128xf32>
    %11 = vector.broadcast %9 : vector<1x128xf32> to vector<8x128xf32>
    %12 = arith.addf %10, %11 : vector<8x128xf32>
    %cst_11 = arith.constant 0.000000e+00 : f32
    %13 = vector.broadcast %cst_11 : f32 to vector<8x128xf32>
    %14 = arith.maximumf %12, %13 : vector<8x128xf32>
    %c0_12 = arith.constant 0 : index
    %c0_13 = arith.constant 0 : index
    %15 = vector.load %arg6[%c0_12, %c0_13] : memref<128x128xf32, #tpu.memory_space<vmem>>, vector<128x128xf32>
    %c0_14 = arith.constant 0 : index
    %c0_15 = arith.constant 0 : index
    %16 = vector.load %arg7[%c0_14, %c0_15] : memref<1x128xf32, #tpu.memory_space<vmem>>, vector<1x128xf32>
    %cst_16 = arith.constant dense<0.000000e+00> : vector<8x128xf32>
    %17 = tpu.matmul %14, %15, %cst_16 {dimension_numbers = #tpu.dot_dimension_numbers<[1], [0], [0], [1], [0, 0, 1, 1], [], []>, precision = #tpu.contract_precision<fp32>} : vector<8x128xf32>, vector<128x128xf32>, vector<8x128xf32> -> vector<8x128xf32>
    %18 = vector.broadcast %16 : vector<1x128xf32> to vector<8x128xf32>
    %19 = arith.addf %17, %18 : vector<8x128xf32>
    %c0_17 = arith.constant 0 : index
    %c0_18 = arith.constant 0 : index
    %20 = vector.load %arg8[%c0_17, %c0_18] : memref<8x128xf32, #tpu.memory_space<vmem>>, vector<8x128xf32>
    tpu.vector_store %arg8[%c0_17, %c0_18], %19 {strides = array<i32>} : memref<8x128xf32, #tpu.memory_space<vmem>>, vector<8x128xf32>,
    return
  }
  func.func @transform_0(%arg0: i32) -> (i32, i32) {
    %c0_i32 = arith.constant 0 : i32
    %c0_i32_0 = arith.constant 0 : i32
    return %arg0, %c0_i32 : i32, i32
  }
  func.func @transform_1(%arg0: i32) -> (i32, i32) {
    %c0_i32 = arith.constant 0 : i32
    %c0_i32_0 = arith.constant 0 : i32
    %c0_i32_1 = arith.constant 0 : i32
    return %c0_i32, %c0_i32_0 : i32, i32
  }
  func.func @transform_2(%arg0: i32) -> (i32, i32) {
    %c0_i32 = arith.constant 0 : i32
    %c0_i32_0 = arith.constant 0 : i32
    %c0_i32_1 = arith.constant 0 : i32
    return %c0_i32, %c0_i32_0 : i32, i32
  }
  func.func @transform_3(%arg0: i32) -> (i32, i32) {
    %c0_i32 = arith.constant 0 : i32
    %c0_i32_0 = arith.constant 0 : i32
    %c0_i32_1 = arith.constant 0 : i32
    return %c0_i32, %c0_i32_0 : i32, i32
  }
  func.func @transform_4(%arg0: i32) -> (i32, i32) {
    %c0_i32 = arith.constant 0 : i32
    %c0_i32_0 = arith.constant 0 : i32
    %c0_i32_1 = arith.constant 0 : i32
    return %c0_i32, %c0_i32_0 : i32, i32
  }
  func.func @transform_5(%arg0: i32) -> (i32, i32) {
    %c0_i32 = arith.constant 0 : i32
    %c0_i32_0 = arith.constant 0 : i32
    %c0_i32_1 = arith.constant 0 : i32
    return %c0_i32, %c0_i32_0 : i32, i32
  }
  func.func @transform_6(%arg0: i32) -> (i32, i32) {
    %c0_i32 = arith.constant 0 : i32
    %c0_i32_0 = arith.constant 0 : i32
    %c0_i32_1 = arith.constant 0 : i32
    return %c0_i32, %c0_i32_0 : i32, i32
  }
  func.func @transform_7(%arg0: i32) -> (i32, i32) {
    %c0_i32 = arith.constant 0 : i32
    %c0_i32_0 = arith.constant 0 : i32
    return %arg0, %c0_i32 : i32, i32
  }
}

</mosaic_0001>

<llo_original>
// kernel: tpu_custom_call.1
$region0: #{tpu_custom_call.1}
  #allocation0 [shape = 'u32[]', space=smem, size = 0x4, offset = 0x4, fixed_abs, tag = 'smem constant byte address 0x4 - core index']
  #allocation1 [shape = 'u32[144,128]{1,0:T(1,128)}', space=vmem, size = 0x12000, scoped, tag = 'internal scratch']
  %s0 = inlined_call_operand.hbm [shape: f32[8,16], index: 0, kind: input, shape index: {}]
  %s1 = inlined_call_operand.hbm [shape: f32[16,128], index: 1, kind: input, shape index: {}]
  %s2 = inlined_call_operand.vmem [shape: f32[1,128], index: 2, kind: input, shape index: {}]
  %s3 = inlined_call_operand.hbm [shape: f32[128,128], index: 3, kind: input, shape index: {}]
  %s4 = inlined_call_operand.vmem [shape: f32[1,128], index: 4, kind: input, shape index: {}]
  %s5 = inlined_call_operand.hbm [shape: f32[128,128], index: 5, kind: input, shape index: {}]
  %s6 = inlined_call_operand.vmem [shape: f32[1,128], index: 6, kind: input, shape index: {}]
  %s7 = inlined_call_operand.hbm [shape: f32[8,128], index: 7, kind: output, shape index: {}]
  %s8 = sld [smem:[#allocation0]]
  $region54: #{tpu_custom_call.1} parent=0
    _
  %s10 = ssub.s32 1, %s8
  %s11 = scalar_select 0, %s10, %s8
  $region1: #{tpu_custom_call.1} parent=0
    #allocation2 [shape = 'u8[4096]{0}', space=vmem, size = 0x1000, scoped, tag = 'input window, operand 0, single buffered']
    #allocation3 [shape = 's32[1]{0}', space=sflag, size = 0x4, scoped, tag = 'scoped memory for tpu_custom_call.1']
    #allocation4 [shape = 's32[1]{0}', space=sflag, size = 0x4, scoped, tag = 'scoped memory for tpu_custom_call.1']
    #allocation5 [shape = 'u8[8192]{0}', space=vmem, size = 0x2000, scoped, tag = 'input window, operand 1, single buffered']
    #allocation6 [shape = 's32[1]{0}', space=sflag, size = 0x4, scoped, tag = 'scoped memory for tpu_custom_call.1']
    #allocation7 [shape = 'u8[65536]{0}', space=vmem, size = 0x10000, scoped, tag = 'input window, operand 3, single buffered']
    #allocation8 [shape = 'u8[65536]{0}', space=vmem, size = 0x10000, scoped, tag = 'input window, operand 5, single buffered']
    #allocation9 [shape = 's32[1]{0}', space=sflag, size = 0x4, scoped, tag = 'scoped memory for tpu_custom_call.1']
    #allocation10 [shape = 'u8[4096]{0}', space=vmem, size = 0x1000, scoped, tag = 'output window, operand 0, single buffered']
    %12 = vsyncpa [#allocation3], 0
    %13 = vsyncpa [#allocation6], 0
    %14 = vsyncpa [#allocation9], 0
    %15 = vsyncpa [#allocation4], 0
    // Predicated region
    $region2: #{tpu_custom_call.1} parent=1 // pred_check
      _
    $region3: #{tpu_custom_call.1} parent=1 // pred_check_branch
      %17 = sbr.rel (0) target = $region5
    $region4: #{tpu_custom_call.1} parent=1 // pred_region
      %s19 = ssub.s32 128, 128
      %20 = vsyncadd [#allocation3], %s19
      %s22 = sshll.u32 [#allocation2], 4
      %s23 = int_to_ptr.vmem [resolvable:$true] %s22
      %25 = dma.hbm_to_vmem [thread:$0]  %s0, 128, %s23, [#allocation3]
    $region5: #{tpu_custom_call.1} parent=1 // pred_fallthru
      _
    // Predicated region
    $region6: #{tpu_custom_call.1} parent=1 // pred_check
      _
    $region7: #{tpu_custom_call.1} parent=1 // pred_check_branch
      %27 = sbr.rel (0) target = $region9
    $region8: #{tpu_custom_call.1} parent=1 // pred_region
      %s29 = ssub.s32 256, 256
      %30 = vsyncadd [#allocation6], %s29
      %s31 = sshll.u32 [#allocation5], 4
      %s32 = int_to_ptr.vmem [resolvable:$true] %s31
      %37 = dma.hbm_to_vmem [thread:$0]  %s1, 256, %s32, [#allocation6], 128, 128, 8
    $region9: #{tpu_custom_call.1} parent=1 // pred_fallthru
      _
    // Predicated region
    $region10: #{tpu_custom_call.1} parent=1 // pred_check
      _
    $region11: #{tpu_custom_call.1} parent=1 // pred_check_branch
      %39 = sbr.rel (0) target = $region13
    $region12: #{tpu_custom_call.1} parent=1 // pred_region
      _
    $region13: #{tpu_custom_call.1} parent=1 // pred_fallthru
      _
    // Predicated region
    $region14: #{tpu_custom_call.1} parent=1 // pred_check
      _
    $region15: #{tpu_custom_call.1} parent=1 // pred_check_branch
      %41 = sbr.rel (0) target = $region17
    $region16: #{tpu_custom_call.1} parent=1 // pred_region
      %s43 = ssub.s32 2048, 2048
      %44 = vsyncadd [#allocation6], %s43
      %s45 = sshll.u32 [#allocation7], 4
      %s46 = int_to_ptr.vmem [resolvable:$true] %s45
      %51 = dma.hbm_to_vmem [thread:$0]  %s3, 2048, %s46, [#allocation6], 128, 128, 8
    $region17: #{tpu_custom_call.1} parent=1 // pred_fallthru
      _
    // Predicated region
    $region18: #{tpu_custom_call.1} parent=1 // pred_check
      _
    $region19: #{tpu_custom_call.1} parent=1 // pred_check_branch
      %53 = sbr.rel (0) target = $region21
    $region20: #{tpu_custom_call.1} parent=1 // pred_region
      _
    $region21: #{tpu_custom_call.1} parent=1 // pred_fallthru
      _
    // Predicated region
    $region22: #{tpu_custom_call.1} parent=1 // pred_check
      _
    $region23: #{tpu_custom_call.1} parent=1 // pred_check_branch
      %55 = sbr.rel (0) target = $region25
    $region24: #{tpu_custom_call.1} parent=1 // pred_region
      %s57 = ssub.s32 2048, 2048
      %58 = vsyncadd [#allocation9], %s57
      %s59 = sshll.u32 [#allocation8], 4
      %s60 = int_to_ptr.vmem [resolvable:$true] %s59
      %65 = dma.hbm_to_vmem [thread:$0]  %s5, 2048, %s60, [#allocation9], 128, 128, 8
    $region25: #{tpu_custom_call.1} parent=1 // pred_fallthru
      _
    // Predicated region
    $region26: #{tpu_custom_call.1} parent=1 // pred_check
      _
    $region27: #{tpu_custom_call.1} parent=1 // pred_check_branch
      %67 = sbr.rel (0) target = $region29
    $region28: #{tpu_custom_call.1} parent=1 // pred_region
      _
    $region29: #{tpu_custom_call.1} parent=1 // pred_fallthru
      _
    // Predicated region
    $region30: #{tpu_custom_call.1} parent=1 // pred_check
      _
    $region31: #{tpu_custom_call.1} parent=1 // pred_check_branch
      %69 = sbr.rel (0) target = $region33
    $region32: #{tpu_custom_call.1} parent=1 // pred_region
      %70 = dma.done [#allocation3], 128
    $region33: #{tpu_custom_call.1} parent=1 // pred_fallthru
      _
    // Predicated region
    $region34: #{tpu_custom_call.1} parent=1 // pred_check
      _
    $region35: #{tpu_custom_call.1} parent=1 // pred_check_branch
      %72 = sbr.rel (0) target = $region37
    $region36: #{tpu_custom_call.1} parent=1 // pred_region
      %73 = dma.done [#allocation6], 256
    $region37: #{tpu_custom_call.1} parent=1 // pred_fallthru
      _
    // Predicated region
    $region38: #{tpu_custom_call.1} parent=1 // pred_check
      _
    $region39: #{tpu_custom_call.1} parent=1 // pred_check_branch
      %75 = sbr.rel (0) target = $region41
    $region40: #{tpu_custom_call.1} parent=1 // pred_region
      %76 = dma.done [#allocation6], 2048
    $region41: #{tpu_custom_call.1} parent=1 // pred_fallthru
      _
    // Predicated region
    $region42: #{tpu_custom_call.1} parent=1 // pred_check
      _
    $region43: #{tpu_custom_call.1} parent=1 // pred_check_branch
      %78 = sbr.rel (0) target = $region45
    $region44: #{tpu_custom_call.1} parent=1 // pred_region
      %79 = dma.done [#allocation9], 2048
    $region45: #{tpu_custom_call.1} parent=1 // pred_fallthru
      _
    %v80 = vld [vmem:[#allocation2] sm:$0xff]
    %v81 = vld [vmem:[#allocation5] sm:$0xff]
    %v82 = vld [vmem:[#allocation5 + $0x8] sm:$0xff]
    %v83 = vld [vmem:[%s2] sm:$0x1]
    %v85 = vlaneseq
    %v86 = vshrl.u32 %v85, 7
    %v87 = vsub.s32 0, %v86
    %v88 = vrot.slane %v83, %v87
    %vm90 = vcmask 130048
    %v92 = vsel %vm90, %v80, 0
    %94 = vmatprep.subr.mxu0 0.0
    %v95 = vand.u32 %v81, 4294901760
    %96 = vmatpush1.msra.mxu0 %v95
    %97 = vmatprep.subr.mxu0 0.0
    %v98 = vand.u32 %v82, 4294901760
    %99 = vmatpush1.msra.mxu0 %v98
    %100 = vmatprep.subr.mxu0 0.0
    %101 = vmatpush1.msra.mxu0 0.0
    %102 = vmatprep.subr.mxu0 0.0
    %103 = vmatpush1.msra.mxu0 0.0
    %104 = vmatprep.subr.mxu0 0.0
    %105 = vmatpush1.msra.mxu0 0.0
    %106 = vmatprep.subr.mxu0 0.0
    %107 = vmatpush1.msra.mxu0 0.0
    %108 = vmatprep.subr.mxu0 0.0
    %109 = vmatpush1.msra.mxu0 0.0
    %110 = vmatprep.subr.mxu0 0.0
    %111 = vmatpush1.msra.mxu0 0.0
    %112 = vmatprep.subr.mxu0 0.0
    %113 = vmatpush1.msra.mxu0 0.0
    %114 = vmatprep.subr.mxu0 0.0
    %115 = vmatpush1.msra.mxu0 0.0
    %116 = vmatprep.subr.mxu0 0.0
    %117 = vmatpush1.msra.mxu0 0.0
    %118 = vmatprep.subr.mxu0 0.0
    %119 = vmatpush1.msra.mxu0 0.0
    %120 = vmatprep.subr.mxu0 0.0
    %121 = vmatpush1.msra.mxu0 0.0
    %122 = vmatprep.subr.mxu0 0.0
    %123 = vmatpush1.msra.mxu0 0.0
    %124 = vmatprep.subr.mxu0 0.0
    %125 = vmatpush1.msra.mxu0 0.0
    %126 = vmatprep.subr.mxu0 0.0
    %127 = vmatpush1.msra.mxu0 0.0
    %128 = vmatprep.subr.mxu0 0.0
    %129 = vmatpush1.msra.mxu0 0.0
    %130 = vmatprep.subr.mxu0 0.0
    %131 = vmatpush1.msra.mxu0 0.0
    %132 = vmatprep.subr.mxu0 0.0
    %133 = vmatpush1.msra.mxu0 0.0
    %134 = vmatprep.subr.mxu0 0.0
    %135 = vmatpush1.msra.mxu0 0.0
    %136 = vmatprep.subr.mxu0 0.0
    %137 = vmatpush1.msra.mxu0 0.0
    %138 = vmatprep.subr.mxu0 0.0
    %139 = vmatpush1.msra.mxu0 0.0
    %140 = vmatprep.subr.mxu0 0.0
    %141 = vmatpush1.msra.mxu0 0.0
    %142 = vmatprep.subr.mxu0 0.0
    %143 = vmatpush1.msra.mxu0 0.0
    %144 = vmatprep.subr.mxu0 0.0
    %145 = vmatpush1.msra.mxu0 0.0
    %146 = vmatprep.subr.mxu0 0.0
    %147 = vmatpush1.msra.mxu0 0.0
    %148 = vmatprep.subr.mxu0 0.0
    %149 = vmatpush1.msra.mxu0 0.0
    %150 = vmatprep.subr.mxu0 0.0
    %151 = vmatpush1.msra.mxu0 0.0
    %152 = vmatprep.subr.mxu0 0.0
    %153 = vmatpush1.msra.mxu0 0.0
    %154 = vmatprep.subr.mxu0 0.0
    %155 = vmatpush1.msra.mxu0 0.0
    %156 = vmatprep.subr.mxu0 0.0
    %157 = vmatpush1.msra.mxu0 0.0
    %158 = vmatprep.subr.mxu0 0.0
    %159 = vmatpush1.msra.mxu0 0.0
    %160 = vmatprep.mubr.f32.mxu0 0.0
    %v161 = vand.u32 %v92, 4294901760
    %v162 = vsub.f32 %v92, %v161
    %v163 = vand.u32 %v162, 4294901760
    %v164 = vsub.f32 %v162, %v163
    %v165 = vand.u32 %v164, 4294901760
    %166 = vmatmul.mubr.f32.gmra.mrb[0].mxu0 %v165
    %v167 = vpop.f32.mrb[0].mxu0
    %v168 = vadd.f32 %v88, %v167
    %v169 = vpop.f32.mrb[0].mxu0
    %170 = vdwg.mxu0
    %171 = vmatprep.subr.mxu0 0.0
    %v172 = vand.u32 %v81, 4294901760
    %v173 = vsub.f32 %v81, %v172
    %v174 = vand.u32 %v173, 4294901760
    %v175 = vsub.f32 %v173, %v174
    %v176 = vand.u32 %v175, 4294901760
    %177 = vmatpush1.msra.mxu0 %v176
    %178 = vmatprep.subr.mxu0 0.0
    %v179 = vand.u32 %v82, 4294901760
    %v180 = vsub.f32 %v82, %v179
    %v181 = vand.u32 %v180, 4294901760
    %v182 = vsub.f32 %v180, %v181
    %v183 = vand.u32 %v182, 4294901760
    %184 = vmatpush1.msra.mxu0 %v183
    %185 = vmatprep.subr.mxu0 0.0
    %186 = vmatpush1.msra.mxu0 0.0
    %187 = vmatprep.subr.mxu0 0.0
    %188 = vmatpush1.msra.mxu0 0.0
    %189 = vmatprep.subr.mxu0 0.0
    %190 = vmatpush1.msra.mxu0 0.0
    %191 = vmatprep.subr.mxu0 0.0
    %192 = vmatpush1.msra.mxu0 0.0
    %193 = vmatprep.subr.mxu0 0.0
    %194 = vmatpush1.msra.mxu0 0.0
    %195 = vmatprep.subr.mxu0 0.0
    %196 = vmatpush1.msra.mxu0 0.0
    %197 = vmatprep.subr.mxu0 0.0
    %198 = vmatpush1.msra.mxu0 0.0
    %199 = vmatprep.subr.mxu0 0.0
    %200 = vmatpush1.msra.mxu0 0.0
    %201 = vmatprep.subr.mxu0 0.0
    %202 = vmatpush1.msra.mxu0 0.0
    %203 = vmatprep.subr.mxu0 0.0
    %204 = vmatpush1.msra.mxu0 0.0
    %205 = vmatprep.subr.mxu0 0.0
    %206 = vmatpush1.msra.mxu0 0.0
    %207 = vmatprep.subr.mxu0 0.0
    %208 = vmatpush1.msra.mxu0 0.0
    %209 = vmatprep.subr.mxu0 0.0
    %210 = vmatpush1.msra.mxu0 0.0
    %211 = vmatprep.subr.mxu0 0.0
    %212 = vmatpush1.msra.mxu0 0.0
    %213 = vmatprep.subr.mxu0 0.0
    %214 = vmatpush1.msra.mxu0 0.0
    %215 = vmatprep.subr.mxu0 0.0
    %216 = vmatpush1.msra.mxu0 0.0
    %217 = vmatprep.subr.mxu0 0.0
    %218 = vmatpush1.msra.mxu0 0.0
    %219 = vmatprep.subr.mxu0 0.0
    %220 = vmatpush1.msra.mxu0 0.0
    %221 = vmatprep.subr.mxu0 0.0
    %222 = vmatpush1.msra.mxu0 0.0
    %223 = vmatprep.subr.mxu0 0.0
    %224 = vmatpush1.msra.mxu0 0.0
    %225 = vmatprep.subr.mxu0 0.0
    %226 = vmatpush1.msra.mxu0 0.0
    %227 = vmatprep.subr.mxu0 0.0
    %228 = vmatpush1.msra.mxu0 0.0
    %229 = vmatprep.subr.mxu0 0.0
    %230 = vmatpush1.msra.mxu0 0.0
    %231 = vmatprep.subr.mxu0 0.0
    %232 = vmatpush1.msra.mxu0 0.0
    %233 = vmatprep.subr.mxu0 0.0
    %234 = vmatpush1.msra.mxu0 0.0
    %235 = vmatprep.subr.mxu0 0.0
    %236 = vmatpush1.msra.mxu0 0.0
    %237 = vmatprep.subr.mxu0 0.0
    %238 = vmatpush1.msra.mxu0 0.0
    %239 = vmatprep.subr.mxu0 0.0
    %240 = vmatpush1.msra.mxu0 0.0
    %241 = vmatprep.subr.mxu0 0.0
    %242 = vmatpush1.msra.mxu0 0.0
    %243 = vmatprep.subr.mxu0 0.0
    %244 = vmatpush1.msra.mxu0 0.0
    %245 = vmatprep.mubr.f32.mxu0 0.0
    %v246 = vand.u32 %v92, 4294901760
    %247 = vmatmul.mubr.f32.gmra.mrb[0].mxu0 %v246
    %v248 = vpop.f32.mrb[0].mxu0
    %v249 = vadd.f32 %v168, %v248
    %v250 = vpop.f32.mrb[0].mxu0
    %251 = vdwg.mxu0
    %252 = vmatprep.subr.mxu0 0.0
    %v253 = vand.u32 %v81, 4294901760
    %v254 = vsub.f32 %v81, %v253
    %255 = vmatpush1.msra.mxu0 %v254
    %256 = vmatprep.subr.mxu0 0.0
    %v257 = vand.u32 %v82, 4294901760
    %v258 = vsub.f32 %v82, %v257
    %259 = vmatpush1.msra.mxu0 %v258
    %260 = vmatprep.subr.mxu0 0.0
    %261 = vmatpush1.msra.mxu0 0.0
    %262 = vmatprep.subr.mxu0 0.0
    %263 = vmatpush1.msra.mxu0 0.0
    %264 = vmatprep.subr.mxu0 0.0
    %265 = vmatpush1.msra.mxu0 0.0
    %266 = vmatprep.subr.mxu0 0.0
    %267 = vmatpush1.msra.mxu0 0.0
    %268 = vmatprep.subr.mxu0 0.0
    %269 = vmatpush1.msra.mxu0 0.0
    %270 = vmatprep.subr.mxu0 0.0
    %271 = vmatpush1.msra.mxu0 0.0
    %272 = vmatprep.subr.mxu0 0.0
    %273 = vmatpush1.msra.mxu0 0.0
    %274 = vmatprep.subr.mxu0 0.0
    %275 = vmatpush1.msra.mxu0 0.0
    %276 = vmatprep.subr.mxu0 0.0
    %277 = vmatpush1.msra.mxu0 0.0
    %278 = vmatprep.subr.mxu0 0.0
    %279 = vmatpush1.msra.mxu0 0.0
    %280 = vmatprep.subr.mxu0 0.0
    %281 = vmatpush1.msra.mxu0 0.0
    %282 = vmatprep.subr.mxu0 0.0
    %283 = vmatpush1.msra.mxu0 0.0
    %284 = vmatprep.subr.mxu0 0.0
    %285 = vmatpush1.msra.mxu0 0.0
    %286 = vmatprep.subr.mxu0 0.0
    %287 = vmatpush1.msra.mxu0 0.0
    %288 = vmatprep.subr.mxu0 0.0
    %289 = vmatpush1.msra.mxu0 0.0
    %290 = vmatprep.subr.mxu0 0.0
    %291 = vmatpush1.msra.mxu0 0.0
    %292 = vmatprep.subr.mxu0 0.0
    %293 = vmatpush1.msra.mxu0 0.0
    %294 = vmatprep.subr.mxu0 0.0
    %295 = vmatpush1.msra.mxu0 0.0
    %296 = vmatprep.subr.mxu0 0.0
    %297 = vmatpush1.msra.mxu0 0.0
    %298 = vmatprep.subr.mxu0 0.0
    %299 = vmatpush1.msra.mxu0 0.0
    %300 = vmatprep.subr.mxu0 0.0
    %301 = vmatpush1.msra.mxu0 0.0
    %302 = vmatprep.subr.mxu0 0.0
    %303 = vmatpush1.msra.mxu0 0.0
    %304 = vmatprep.subr.mxu0 0.0
    %305 = vmatpush1.msra.mxu0 0.0
    %306 = vmatprep.subr.mxu0 0.0
    %307 = vmatpush1.msra.mxu0 0.0
    %308 = vmatprep.subr.mxu0 0.0
    %309 = vmatpush1.msra.mxu0 0.0
    %310 = vmatprep.subr.mxu0 0.0
    %311 = vmatpush1.msra.mxu0 0.0
    %312 = vmatprep.subr.mxu0 0.0
    %313 = vmatpush1.msra.mxu0 0.0
    %314 = vmatprep.subr.mxu0 0.0
    %315 = vmatpush1.msra.mxu0 0.0
    %316 = vmatprep.subr.mxu0 0.0
    %317 = vmatpush1.msra.mxu0 0.0
    %318 = vmatprep.subr.mxu0 0.0
    %319 = vmatpush1.msra.mxu0 0.0
    %320 = vmatprep.mubr.f32.mxu0 0.0
    %v321 = vand.u32 %v92, 4294901760
    %v322 = vsub.f32 %v92, %v321
    %323 = vmatmul.mubr.f32.gmra.mrb[0].mxu0 %v322
    %v324 = vpop.f32.mrb[0].mxu0
    %v325 = vadd.f32 %v249, %v324
    %v326 = vpop.f32.mrb[0].mxu0
    %327 = vdwg.mxu0
    %328 = vmatprep.subr.mxu0 0.0
    %v329 = vand.u32 %v81, 4294901760
    %330 = vmatpush1.msra.mxu0 %v329
    %331 = vmatprep.subr.mxu0 0.0
    %v332 = vand.u32 %v82, 4294901760
    %333 = vmatpush1.msra.mxu0 %v332
    %334 = vmatprep.subr.mxu0 0.0
    %335 = vmatpush1.msra.mxu0 0.0
    %336 = vmatprep.subr.mxu0 0.0
    %337 = vmatpush1.msra.mxu0 0.0
    %338 = vmatprep.subr.mxu0 0.0
    %339 = vmatpush1.msra.mxu0 0.0
    %340 = vmatprep.subr.mxu0 0.0
    %341 = vmatpush1.msra.mxu0 0.0
    %342 = vmatprep.subr.mxu0 0.0
    %343 = vmatpush1.msra.mxu0 0.0
    %344 = vmatprep.subr.mxu0 0.0
    %345 = vmatpush1.msra.mxu0 0.0
    %346 = vmatprep.subr.mxu0 0.0
    %347 = vmatpush1.msra.mxu0 0.0
    %348 = vmatprep.subr.mxu0 0.0
    %349 = vmatpush1.msra.mxu0 0.0
    %350 = vmatprep.subr.mxu0 0.0
    %351 = vmatpush1.msra.mxu0 0.0
    %352 = vmatprep.subr.mxu0 0.0
    %353 = vmatpush1.msra.mxu0 0.0
    %354 = vmatprep.subr.mxu0 0.0
    %355 = vmatpush1.msra.mxu0 0.0
    %356 = vmatprep.subr.mxu0 0.0
    %357 = vmatpush1.msra.mxu0 0.0
    %358 = vmatprep.subr.mxu0 0.0
    %359 = vmatpush1.msra.mxu0 0.0
    %360 = vmatprep.subr.mxu0 0.0
    %361 = vmatpush1.msra.mxu0 0.0
    %362 = vmatprep.subr.mxu0 0.0
    %363 = vmatpush1.msra.mxu0 0.0
    %364 = vmatprep.subr.mxu0 0.0
    %365 = vmatpush1.msra.mxu0 0.0
    %366 = vmatprep.subr.mxu0 0.0
    %367 = vmatpush1.msra.mxu0 0.0
    %368 = vmatprep.subr.mxu0 0.0
    %369 = vmatpush1.msra.mxu0 0.0
    %370 = vmatprep.subr.mxu0 0.0
    %371 = vmatpush1.msra.mxu0 0.0
    %372 = vmatprep.subr.mxu0 0.0
    %373 = vmatpush1.msra.mxu0 0.0
    %374 = vmatprep.subr.mxu0 0.0
    %375 = vmatpush1.msra.mxu0 0.0
    %376 = vmatprep.subr.mxu0 0.0
    %377 = vmatpush1.msra.mxu0 0.0
    %378 = vmatprep.subr.mxu0 0.0
    %379 = vmatpush1.msra.mxu0 0.0
    %380 = vmatprep.subr.mxu0 0.0
    %381 = vmatpush1.msra.mxu0 0.0
    %382 = vmatprep.subr.mxu0 0.0
    %383 = vmatpush1.msra.mxu0 0.0
    %384 = vmatprep.subr.mxu0 0.0
    %385 = vmatpush1.msra.mxu0 0.0
    %386 = vmatprep.subr.mxu0 0.0
    %387 = vmatpush1.msra.mxu0 0.0
    %388 = vmatprep.subr.mxu0 0.0
    %389 = vmatpush1.msra.mxu0 0.0
    %390 = vmatprep.subr.mxu0 0.0
    %391 = vmatpush1.msra.mxu0 0.0
    %392 = vmatprep.subr.mxu0 0.0
    %393 = vmatpush1.msra.mxu0 0.0
    %394 = vmatprep.mubr.f32.mxu0 0.0
    %v395 = vand.u32 %v92, 4294901760
    %v396 = vsub.f32 %v92, %v395
    %v397 = vand.u32 %v396, 4294901760
    %398 = vmatmul.mubr.f32.gmra.mrb[0].mxu0 %v397
    %v399 = vpop.f32.mrb[0].mxu0
    %v400 = vadd.f32 %v325, %v399
    %v401 = vpop.f32.mrb[0].mxu0
    %402 = vdwg.mxu0
    %403 = vmatprep.subr.mxu0 0.0
    %v404 = vand.u32 %v81, 4294901760
    %v405 = vsub.f32 %v81, %v404
    %v406 = vand.u32 %v405, 4294901760
    %407 = vmatpush1.msra.mxu0 %v406
    %408 = vmatprep.subr.mxu0 0.0
    %v409 = vand.u32 %v82, 4294901760
    %v410 = vsub.f32 %v82, %v409
    %v411 = vand.u32 %v410, 4294901760
    %412 = vmatpush1.msra.mxu0 %v411
    %413 = vmatprep.subr.mxu0 0.0
    %414 = vmatpush1.msra.mxu0 0.0
    %415 = vmatprep.subr.mxu0 0.0
    %416 = vmatpush1.msra.mxu0 0.0
    %417 = vmatprep.subr.mxu0 0.0
    %418 = vmatpush1.msra.mxu0 0.0
    %419 = vmatprep.subr.mxu0 0.0
    %420 = vmatpush1.msra.mxu0 0.0
    %421 = vmatprep.subr.mxu0 0.0
    %422 = vmatpush1.msra.mxu0 0.0
    %423 = vmatprep.subr.mxu0 0.0
    %424 = vmatpush1.msra.mxu0 0.0
    %425 = vmatprep.subr.mxu0 0.0
    %426 = vmatpush1.msra.mxu0 0.0
    %427 = vmatprep.subr.mxu0 0.0
    %428 = vmatpush1.msra.mxu0 0.0
    %429 = vmatprep.subr.mxu0 0.0
    %430 = vmatpush1.msra.mxu0 0.0
    %431 = vmatprep.subr.mxu0 0.0
    %432 = vmatpush1.msra.mxu0 0.0
    %433 = vmatprep.subr.mxu0 0.0
    %434 = vmatpush1.msra.mxu0 0.0
    %435 = vmatprep.subr.mxu0 0.0
    %436 = vmatpush1.msra.mxu0 0.0
    %437 = vmatprep.subr.mxu0 0.0
    %438 = vmatpush1.msra.mxu0 0.0
    %439 = vmatprep.subr.mxu0 0.0
    %440 = vmatpush1.msra.mxu0 0.0
    %441 = vmatprep.subr.mxu0 0.0
    %442 = vmatpush1.msra.mxu0 0.0
    %443 = vmatprep.subr.mxu0 0.0
    %444 = vmatpush1.msra.mxu0 0.0
    %445 = vmatprep.subr.mxu0 0.0
    %446 = vmatpush1.msra.mxu0 0.0
    %447 = vmatprep.subr.mxu0 0.0
    %448 = vmatpush1.msra.mxu0 0.0
    %449 = vmatprep.subr.mxu0 0.0
    %450 = vmatpush1.msra.mxu0 0.0
    %451 = vmatprep.subr.mxu0 0.0
    %452 = vmatpush1.msra.mxu0 0.0
    %453 = vmatprep.subr.mxu0 0.0
    %454 = vmatpush1.msra.mxu0 0.0
    %455 = vmatprep.subr.mxu0 0.0
    %456 = vmatpush1.msra.mxu0 0.0
    %457 = vmatprep.subr.mxu0 0.0
    %458 = vmatpush1.msra.mxu0 0.0
    %459 = vmatprep.subr.mxu0 0.0
    %460 = vmatpush1.msra.mxu0 0.0
    %461 = vmatprep.subr.mxu0 0.0
    %462 = vmatpush1.msra.mxu0 0.0
    %463 = vmatprep.subr.mxu0 0.0
    %464 = vmatpush1.msra.mxu0 0.0
    %465 = vmatprep.subr.mxu0 0.0
    %466 = vmatpush1.msra.mxu0 0.0
    %467 = vmatprep.subr.mxu0 0.0
    %468 = vmatpush1.msra.mxu0 0.0
    %469 = vmatprep.subr.mxu0 0.0
    %470 = vmatpush1.msra.mxu0 0.0
    %471 = vmatprep.subr.mxu0 0.0
    %472 = vmatpush1.msra.mxu0 0.0
    %473 = vmatprep.mubr.f32.mxu0 0.0
    %v474 = vand.u32 %v92, 4294901760
    %475 = vmatmul.mubr.f32.gmra.mrb[0].mxu0 %v474
    %v476 = vpop.f32.mrb[0].mxu0
    %v477 = vadd.f32 %v400, %v476
    %v478 = vpop.f32.mrb[0].mxu0
    %479 = vdwg.mxu0
    %480 = vmatprep.subr.mxu0 0.0
    %v481 = vand.u32 %v81, 4294901760
    %482 = vmatpush1.msra.mxu0 %v481
    %483 = vmatprep.subr.mxu0 0.0
    %v484 = vand.u32 %v82, 4294901760
    %485 = vmatpush1.msra.mxu0 %v484
    %486 = vmatprep.subr.mxu0 0.0
    %487 = vmatpush1.msra.mxu0 0.0
    %488 = vmatprep.subr.mxu0 0.0
    %489 = vmatpush1.msra.mxu0 0.0
    %490 = vmatprep.subr.mxu0 0.0
    %491 = vmatpush1.msra.mxu0 0.0
    %492 = vmatprep.subr.mxu0 0.0
    %493 = vmatpush1.msra.mxu0 0.0
    %494 = vmatprep.subr.mxu0 0.0
    %495 = vmatpush1.msra.mxu0 0.0
    %496 = vmatprep.subr.mxu0 0.0
    %497 = vmatpush1.msra.mxu0 0.0
    %498 = vmatprep.subr.mxu0 0.0
    %499 = vmatpush1.msra.mxu0 0.0
    %500 = vmatprep.subr.mxu0 0.0
    %501 = vmatpush1.msra.mxu0 0.0
    %502 = vmatprep.subr.mxu0 0.0
    %503 = vmatpush1.msra.mxu0 0.0
    %504 = vmatprep.subr.mxu0 0.0
    %505 = vmatpush1.msra.mxu0 0.0
    %506 = vmatprep.subr.mxu0 0.0
    %507 = vmatpush1.msra.mxu0 0.0
    %508 = vmatprep.subr.mxu0 0.0
    %509 = vmatpush1.msra.mxu0 0.0
    %510 = vmatprep.subr.mxu0 0.0
    %511 = vmatpush1.msra.mxu0 0.0
    %512 = vmatprep.subr.mxu0 0.0
    %513 = vmatpush1.msra.mxu0 0.0
    %514 = vmatprep.subr.mxu0 0.0
    %515 = vmatpush1.msra.mxu0 0.0
    %516 = vmatprep.subr.mxu0 0.0
    %517 = vmatpush1.msra.mxu0 0.0
    %518 = vmatprep.subr.mxu0 0.0
    %519 = vmatpush1.msra.mxu0 0.0
    %520 = vmatprep.subr.mxu0 0.0
    %521 = vmatpush1.msra.mxu0 0.0
    %522 = vmatprep.subr.mxu0 0.0
    %523 = vmatpush1.msra.mxu0 0.0
    %524 = vmatprep.subr.mxu0 0.0
    %525 = vmatpush1.msra.mxu0 0.0
    %526 = vmatprep.subr.mxu0 0.0
    %527 = vmatpush1.msra.mxu0 0.0
    %528 = vmatprep.subr.mxu0 0.0
    %529 = vmatpush1.msra.mxu0 0.0
    %530 = vmatprep.subr.mxu0 0.0
    %531 = vmatpush1.msra.mxu0 0.0
    %532 = vmatprep.subr.mxu0 0.0
    %533 = vmatpush1.msra.mxu0 0.0
    %534 = vmatprep.subr.mxu0 0.0
    %535 = vmatpush1.msra.mxu0 0.0
    %536 = vmatprep.subr.mxu0 0.0
    %537 = vmatpush1.msra.mxu0 0.0
    %538 = vmatprep.subr.mxu0 0.0
    %539 = vmatpush1.msra.mxu0 0.0
    %540 = vmatprep.subr.mxu0 0.0
    %541 = vmatpush1.msra.mxu0 0.0
    %542 = vmatprep.subr.mxu0 0.0
    %543 = vmatpush1.msra.mxu0 0.0
    %544 = vmatprep.subr.mxu0 0.0
    %545 = vmatpush1.msra.mxu0 0.0
    %546 = vmatprep.mubr.f32.mxu0 0.0
    %v547 = vand.u32 %v92, 4294901760
    %548 = vmatmul.mubr.f32.gmra.mrb[0].mxu0 %v547
    %v549 = vpop.f32.mrb[0].mxu0
    %v550 = vadd.f32 %v477, %v549
    %v551 = vpop.f32.mrb[0].mxu0
    %552 = vdwg.mxu0
    %v553 = vmax.f32 %v550, 0.0
    %v554 = vld [vmem:[#allocation7] sm:$0xff]
    %v555 = vld [vmem:[#allocation7 + $0x8] sm:$0xff]
    %v556 = vld [vmem:[#allocation7 + $0x10] sm:$0xff]
    %v557 = vld [vmem:[#allocation7 + $0x18] sm:$0xff]
    %v558 = vld [vmem:[#allocation7 + $0x20] sm:$0xff]
    %v559 = vld [vmem:[#allocation7 + $0x28] sm:$0xff]
    %v560 = vld [vmem:[#allocation7 + $0x30] sm:$0xff]
    %v561 = vld [vmem:[#allocation7 + $0x38] sm:$0xff]
    %v562 = vld [vmem:[#allocation7 + $0x40] sm:$0xff]
    %v563 = vld [vmem:[#allocation7 + $0x48] sm:$0xff]
    %v564 = vld [vmem:[#allocation7 + $0x50] sm:$0xff]
    %v565 = vld [vmem:[#allocation7 + $0x58] sm:$0xff]
    %v566 = vld [vmem:[#allocation7 + $0x60] sm:$0xff]
    %v567 = vld [vmem:[#allocation7 + $0x68] sm:$0xff]
    %v568 = vld [vmem:[#allocation7 + $0x70] sm:$0xff]
    %v569 = vld [vmem:[#allocation7 + $0x78] sm:$0xff]
    %v570 = vld [vmem:[%s4] sm:$0x1]
    %v572 = vlaneseq
    %v573 = vshrl.u32 %v572, 7
    %v574 = vsub.s32 0, %v573
    %v575 = vrot.slane %v570, %v574
    %577 = vmatprep.subr.mxu0 0.0
    %v578 = vand.u32 %v554, 4294901760
    %579 = vmatpush1.msra.mxu0 %v578
    %580 = vmatprep.subr.mxu0 0.0
    %v581 = vand.u32 %v555, 4294901760
    %582 = vmatpush1.msra.mxu0 %v581
    %583 = vmatprep.subr.mxu0 0.0
    %v584 = vand.u32 %v556, 4294901760
    %585 = vmatpush1.msra.mxu0 %v584
    %586 = vmatprep.subr.mxu0 0.0
    %v587 = vand.u32 %v557, 4294901760
    %588 = vmatpush1.msra.mxu0 %v587
    %589 = vmatprep.subr.mxu0 0.0
    %v590 = vand.u32 %v558, 4294901760
    %591 = vmatpush1.msra.mxu0 %v590
    %592 = vmatprep.subr.mxu0 0.0
    %v593 = vand.u32 %v559, 4294901760
    %594 = vmatpush1.msra.mxu0 %v593
    %595 = vmatprep.subr.mxu0 0.0
    %v596 = vand.u32 %v560, 4294901760
    %597 = vmatpush1.msra.mxu0 %v596
    %598 = vmatprep.subr.mxu0 0.0
    %v599 = vand.u32 %v561, 4294901760
    %600 = vmatpush1.msra.mxu0 %v599
    %601 = vmatprep.subr.mxu0 0.0
    %v602 = vand.u32 %v562, 4294901760
    %603 = vmatpush1.msra.mxu0 %v602
    %604 = vmatprep.subr.mxu0 0.0
    %v605 = vand.u32 %v563, 4294901760
    %606 = vmatpush1.msra.mxu0 %v605
    %607 = vmatprep.subr.mxu0 0.0
    %v608 = vand.u32 %v564, 4294901760
    %609 = vmatpush1.msra.mxu0 %v608
    %610 = vmatprep.subr.mxu0 0.0
    %v611 = vand.u32 %v565, 4294901760
    %612 = vmatpush1.msra.mxu0 %v611
    %613 = vmatprep.subr.mxu0 0.0
    %v614 = vand.u32 %v566, 4294901760
    %615 = vmatpush1.msra.mxu0 %v614
    %616 = vmatprep.subr.mxu0 0.0
    %v617 = vand.u32 %v567, 4294901760
    %618 = vmatpush1.msra.mxu0 %v617
    %619 = vmatprep.subr.mxu0 0.0
    %v620 = vand.u32 %v568, 4294901760
    %621 = vmatpush1.msra.mxu0 %v620
    %622 = vmatprep.subr.mxu0 0.0
    %v623 = vand.u32 %v569, 4294901760
    %624 = vmatpush1.msra.mxu0 %v623
    %625 = vmatprep.subr.mxu0 0.0
    %626 = vmatpush1.msra.mxu0 0.0
    %627 = vmatprep.subr.mxu0 0.0
    %628 = vmatpush1.msra.mxu0 0.0
    %629 = vmatprep.subr.mxu0 0.0
    %630 = vmatpush1.msra.mxu0 0.0
    %631 = vmatprep.subr.mxu0 0.0
    %632 = vmatpush1.msra.mxu0 0.0
    %633 = vmatprep.subr.mxu0 0.0
    %634 = vmatpush1.msra.mxu0 0.0
    %635 = vmatprep.subr.mxu0 0.0
    %636 = vmatpush1.msra.mxu0 0.0
    %637 = vmatprep.subr.mxu0 0.0
    %638 = vmatpush1.msra.mxu0 0.0
    %639 = vmatprep.subr.mxu0 0.0
    %640 = vmatpush1.msra.mxu0 0.0
    %641 = vmatprep.subr.mxu0 0.0
    %642 = vmatpush1.msra.mxu0 0.0
    %643 = vmatprep.subr.mxu0 0.0
    %644 = vmatpush1.msra.mxu0 0.0
    %645 = vmatprep.subr.mxu0 0.0
    %646 = vmatpush1.msra.mxu0 0.0
    %647 = vmatprep.subr.mxu0 0.0
    %648 = vmatpush1.msra.mxu0 0.0
    %649 = vmatprep.subr.mxu0 0.0
    %650 = vmatpush1.msra.mxu0 0.0
    %651 = vmatprep.subr.mxu0 0.0
    %652 = vmatpush1.msra.mxu0 0.0
    %653 = vmatprep.subr.mxu0 0.0
    %654 = vmatpush1.msra.mxu0 0.0
    %655 = vmatprep.subr.mxu0 0.0
    %656 = vmatpush1.msra.mxu0 0.0
    %657 = vmatprep.mubr.f32.mxu0 0.0
    %v658 = vand.u32 %v553, 4294901760
    %v659 = vsub.f32 %v553, %v658
    %v660 = vand.u32 %v659, 4294901760
    %v661 = vsub.f32 %v659, %v660
    %v662 = vand.u32 %v661, 4294901760
    %663 = vmatmul.mubr.f32.gmra.mrb[0].mxu0 %v662
    %v664 = vpop.f32.mrb[0].mxu0
    %v665 = vadd.f32 %v575, %v664
    %v666 = vpop.f32.mrb[0].mxu0
    %667 = vdwg.mxu0
    %668 = vmatprep.subr.mxu0 0.0
    %v669 = vand.u32 %v554, 4294901760
    %v670 = vsub.f32 %v554, %v669
    %v671 = vand.u32 %v670, 4294901760
    %v672 = vsub.f32 %v670, %v671
    %v673 = vand.u32 %v672, 4294901760
    %674 = vmatpush1.msra.mxu0 %v673
    %675 = vmatprep.subr.mxu0 0.0
    %v676 = vand.u32 %v555, 4294901760
    %v677 = vsub.f32 %v555, %v676
    %v678 = vand.u32 %v677, 4294901760
    %v679 = vsub.f32 %v677, %v678
    %v680 = vand.u32 %v679, 4294901760
    %681 = vmatpush1.msra.mxu0 %v680
    %682 = vmatprep.subr.mxu0 0.0
    %v683 = vand.u32 %v556, 4294901760
    %v684 = vsub.f32 %v556, %v683
    %v685 = vand.u32 %v684, 4294901760
    %v686 = vsub.f32 %v684, %v685
    %v687 = vand.u32 %v686, 4294901760
    %688 = vmatpush1.msra.mxu0 %v687
    %689 = vmatprep.subr.mxu0 0.0
    %v690 = vand.u32 %v557, 4294901760
    %v691 = vsub.f32 %v557, %v690
    %v692 = vand.u32 %v691, 4294901760
    %v693 = vsub.f32 %v691, %v692
    %v694 = vand.u32 %v693, 4294901760
    %695 = vmatpush1.msra.mxu0 %v694
    %696 = vmatprep.subr.mxu0 0.0
    %v697 = vand.u32 %v558, 4294901760
    %v698 = vsub.f32 %v558, %v697
    %v699 = vand.u32 %v698, 4294901760
    %v700 = vsub.f32 %v698, %v699
    %v701 = vand.u32 %v700, 4294901760
    %702 = vmatpush1.msra.mxu0 %v701
    %703 = vmatprep.subr.mxu0 0.0
    %v704 = vand.u32 %v559, 4294901760
    %v705 = vsub.f32 %v559, %v704
    %v706 = vand.u32 %v705, 4294901760
    %v707 = vsub.f32 %v705, %v706
    %v708 = vand.u32 %v707, 4294901760
    %709 = vmatpush1.msra.mxu0 %v708
    %710 = vmatprep.subr.mxu0 0.0
    %v711 = vand.u32 %v560, 4294901760
    %v712 = vsub.f32 %v560, %v711
    %v713 = vand.u32 %v712, 4294901760
    %v714 = vsub.f32 %v712, %v713
    %v715 = vand.u32 %v714, 4294901760
    %716 = vmatpush1.msra.mxu0 %v715
    %717 = vmatprep.subr.mxu0 0.0
    %v718 = vand.u32 %v561, 4294901760
    %v719 = vsub.f32 %v561, %v718
    %v720 = vand.u32 %v719, 4294901760
    %v721 = vsub.f32 %v719, %v720
    %v722 = vand.u32 %v721, 4294901760
    %723 = vmatpush1.msra.mxu0 %v722
    %724 = vmatprep.subr.mxu0 0.0
    %v725 = vand.u32 %v562, 4294901760
    %v726 = vsub.f32 %v562, %v725
    %v727 = vand.u32 %v726, 4294901760
    %v728 = vsub.f32 %v726, %v727
    %v729 = vand.u32 %v728, 4294901760
    %730 = vmatpush1.msra.mxu0 %v729
    %731 = vmatprep.subr.mxu0 0.0
    %v732 = vand.u32 %v563, 4294901760
    %v733 = vsub.f32 %v563, %v732
    %v734 = vand.u32 %v733, 4294901760
    %v735 = vsub.f32 %v733, %v734
    %v736 = vand.u32 %v735, 4294901760
    %737 = vmatpush1.msra.mxu0 %v736
    %738 = vmatprep.subr.mxu0 0.0
    %v739 = vand.u32 %v564, 4294901760
    %v740 = vsub.f32 %v564, %v739
    %v741 = vand.u32 %v740, 4294901760
    %v742 = vsub.f32 %v740, %v741
    %v743 = vand.u32 %v742, 4294901760
    %744 = vmatpush1.msra.mxu0 %v743
    %745 = vmatprep.subr.mxu0 0.0
    %v746 = vand.u32 %v565, 4294901760
    %v747 = vsub.f32 %v565, %v746
    %v748 = vand.u32 %v747, 4294901760
    %v749 = vsub.f32 %v747, %v748
    %v750 = vand.u32 %v749, 4294901760
    %751 = vmatpush1.msra.mxu0 %v750
    %752 = vmatprep.subr.mxu0 0.0
    %v753 = vand.u32 %v566, 4294901760
    %v754 = vsub.f32 %v566, %v753
    %v755 = vand.u32 %v754, 4294901760
    %v756 = vsub.f32 %v754, %v755
    %v757 = vand.u32 %v756, 4294901760
    %758 = vmatpush1.msra.mxu0 %v757
    %759 = vmatprep.subr.mxu0 0.0
    %v760 = vand.u32 %v567, 4294901760
    %v761 = vsub.f32 %v567, %v760
    %v762 = vand.u32 %v761, 4294901760
    %v763 = vsub.f32 %v761, %v762
    %v764 = vand.u32 %v763, 4294901760
    %765 = vmatpush1.msra.mxu0 %v764
    %766 = vmatprep.subr.mxu0 0.0
    %v767 = vand.u32 %v568, 4294901760
    %v768 = vsub.f32 %v568, %v767
    %v769 = vand.u32 %v768, 4294901760
    %v770 = vsub.f32 %v768, %v769
    %v771 = vand.u32 %v770, 4294901760
    %772 = vmatpush1.msra.mxu0 %v771
    %773 = vmatprep.subr.mxu0 0.0
    %v774 = vand.u32 %v569, 4294901760
    %v775 = vsub.f32 %v569, %v774
    %v776 = vand.u32 %v775, 4294901760
    %v777 = vsub.f32 %v775, %v776
    %v778 = vand.u32 %v777, 4294901760
    %779 = vmatpush1.msra.mxu0 %v778
    %780 = vmatprep.subr.mxu0 0.0
    %781 = vmatpush1.msra.mxu0 0.0
    %782 = vmatprep.subr.mxu0 0.0
    %783 = vmatpush1.msra.mxu0 0.0
    %784 = vmatprep.subr.mxu0 0.0
    %785 = vmatpush1.msra.mxu0 0.0
    %786 = vmatprep.subr.mxu0 0.0
    %787 = vmatpush1.msra.mxu0 0.0
    %788 = vmatprep.subr.mxu0 0.0
    %789 = vmatpush1.msra.mxu0 0.0
    %790 = vmatprep.subr.mxu0 0.0
    %791 = vmatpush1.msra.mxu0 0.0
    %792 = vmatprep.subr.mxu0 0.0
    %793 = vmatpush1.msra.mxu0 0.0
    %794 = vmatprep.subr.mxu0 0.0
    %795 = vmatpush1.msra.mxu0 0.0
    %796 = vmatprep.subr.mxu0 0.0
    %797 = vmatpush1.msra.mxu0 0.0
    %798 = vmatprep.subr.mxu0 0.0
    %799 = vmatpush1.msra.mxu0 0.0
    %800 = vmatprep.subr.mxu0 0.0
    %801 = vmatpush1.msra.mxu0 0.0
    %802 = vmatprep.subr.mxu0 0.0
    %803 = vmatpush1.msra.mxu0 0.0
    %804 = vmatprep.subr.mxu0 0.0
    %805 = vmatpush1.msra.mxu0 0.0
    %806 = vmatprep.subr.mxu0 0.0
    %807 = vmatpush1.msra.mxu0 0.0
    %808 = vmatprep.subr.mxu0 0.0
    %809 = vmatpush1.msra.mxu0 0.0
    %810 = vmatprep.subr.mxu0 0.0
    %811 = vmatpush1.msra.mxu0 0.0
    %812 = vmatprep.mubr.f32.mxu0 0.0
    %v813 = vand.u32 %v553, 4294901760
    %814 = vmatmul.mubr.f32.gmra.mrb[0].mxu0 %v813
    %v815 = vpop.f32.mrb[0].mxu0
    %v816 = vadd.f32 %v665, %v815
    %v817 = vpop.f32.mrb[0].mxu0
    %818 = vdwg.mxu0
    %819 = vmatprep.subr.mxu0 0.0
    %v820 = vand.u32 %v554, 4294901760
    %v821 = vsub.f32 %v554, %v820
    %822 = vmatpush1.msra.mxu0 %v821
    %823 = vmatprep.subr.mxu0 0.0
    %v824 = vand.u32 %v555, 4294901760
    %v825 = vsub.f32 %v555, %v824
    %826 = vmatpush1.msra.mxu0 %v825
    %827 = vmatprep.subr.mxu0 0.0
    %v828 = vand.u32 %v556, 4294901760
    %v829 = vsub.f32 %v556, %v828
    %830 = vmatpush1.msra.mxu0 %v829
    %831 = vmatprep.subr.mxu0 0.0
    %v832 = vand.u32 %v557, 4294901760
    %v833 = vsub.f32 %v557, %v832
    %834 = vmatpush1.msra.mxu0 %v833
    %835 = vmatprep.subr.mxu0 0.0
    %v836 = vand.u32 %v558, 4294901760
    %v837 = vsub.f32 %v558, %v836
    %838 = vmatpush1.msra.mxu0 %v837
    %839 = vmatprep.subr.mxu0 0.0
    %v840 = vand.u32 %v559, 4294901760
    %v841 = vsub.f32 %v559, %v840
    %842 = vmatpush1.msra.mxu0 %v841
    %843 = vmatprep.subr.mxu0 0.0
    %v844 = vand.u32 %v560, 4294901760
    %v845 = vsub.f32 %v560, %v844
    %846 = vmatpush1.msra.mxu0 %v845
    %847 = vmatprep.subr.mxu0 0.0
    %v848 = vand.u32 %v561, 4294901760
    %v849 = vsub.f32 %v561, %v848
    %850 = vmatpush1.msra.mxu0 %v849
    %851 = vmatprep.subr.mxu0 0.0
    %v852 = vand.u32 %v562, 4294901760
    %v853 = vsub.f32 %v562, %v852
    %854 = vmatpush1.msra.mxu0 %v853
    %855 = vmatprep.subr.mxu0 0.0
    %v856 = vand.u32 %v563, 4294901760
    %v857 = vsub.f32 %v563, %v856
    %858 = vmatpush1.msra.mxu0 %v857
    %859 = vmatprep.subr.mxu0 0.0
    %v860 = vand.u32 %v564, 4294901760
    %v861 = vsub.f32 %v564, %v860
    %862 = vmatpush1.msra.mxu0 %v861
    %863 = vmatprep.subr.mxu0 0.0
    %v864 = vand.u32 %v565, 4294901760
    %v865 = vsub.f32 %v565, %v864
    %866 = vmatpush1.msra.mxu0 %v865
    %867 = vmatprep.subr.mxu0 0.0
    %v868 = vand.u32 %v566, 4294901760
    %v869 = vsub.f32 %v566, %v868
    %870 = vmatpush1.msra.mxu0 %v869
    %871 = vmatprep.subr.mxu0 0.0
    %v872 = vand.u32 %v567, 4294901760
    %v873 = vsub.f32 %v567, %v872
    %874 = vmatpush1.msra.mxu0 %v873
    %875 = vmatprep.subr.mxu0 0.0
    %v876 = vand.u32 %v568, 4294901760
    %v877 = vsub.f32 %v568, %v876
    %878 = vmatpush1.msra.mxu0 %v877
    %879 = vmatprep.subr.mxu0 0.0
    %v880 = vand.u32 %v569, 4294901760
    %v881 = vsub.f32 %v569, %v880
    %882 = vmatpush1.msra.mxu0 %v881
    %883 = vmatprep.subr.mxu0 0.0
    %884 = vmatpush1.msra.mxu0 0.0
    %885 = vmatprep.subr.mxu0 0.0
    %886 = vmatpush1.msra.mxu0 0.0
    %887 = vmatprep.subr.mxu0 0.0
    %888 = vmatpush1.msra.mxu0 0.0
    %889 = vmatprep.subr.mxu0 0.0
    %890 = vmatpush1.msra.mxu0 0.0
    %891 = vmatprep.subr.mxu0 0.0
    %892 = vmatpush1.msra.mxu0 0.0
    %893 = vmatprep.subr.mxu0 0.0
    %894 = vmatpush1.msra.mxu0 0.0
    %895 = vmatprep.subr.mxu0 0.0
    %896 = vmatpush1.msra.mxu0 0.0
    %897 = vmatprep.subr.mxu0 0.0
    %898 = vmatpush1.msra.mxu0 0.0
    %899 = vmatprep.subr.mxu0 0.0
    %900 = vmatpush1.msra.mxu0 0.0
    %901 = vmatprep.subr.mxu0 0.0
    %902 = vmatpush1.msra.mxu0 0.0
    %903 = vmatprep.subr.mxu0 0.0
    %904 = vmatpush1.msra.mxu0 0.0
    %905 = vmatprep.subr.mxu0 0.0
    %906 = vmatpush1.msra.mxu0 0.0
    %907 = vmatprep.subr.mxu0 0.0
    %908 = vmatpush1.msra.mxu0 0.0
    %909 = vmatprep.subr.mxu0 0.0
    %910 = vmatpush1.msra.mxu0 0.0
    %911 = vmatprep.subr.mxu0 0.0
    %912 = vmatpush1.msra.mxu0 0.0
    %913 = vmatprep.subr.mxu0 0.0
    %914 = vmatpush1.msra.mxu0 0.0
    %915 = vmatprep.mubr.f32.mxu0 0.0
    %v916 = vand.u32 %v553, 4294901760
    %v917 = vsub.f32 %v553, %v916
    %918 = vmatmul.mubr.f32.gmra.mrb[0].mxu0 %v917
    %v919 = vpop.f32.mrb[0].mxu0
    %v920 = vadd.f32 %v816, %v919
    %v921 = vpop.f32.mrb[0].mxu0
    %922 = vdwg.mxu0
    %923 = vmatprep.subr.mxu0 0.0
    %v924 = vand.u32 %v554, 4294901760
    %925 = vmatpush1.msra.mxu0 %v924
    %926 = vmatprep.subr.mxu0 0.0
    %v927 = vand.u32 %v555, 4294901760
    %928 = vmatpush1.msra.mxu0 %v927
    %929 = vmatprep.subr.mxu0 0.0
    %v930 = vand.u32 %v556, 4294901760
    %931 = vmatpush1.msra.mxu0 %v930
    %932 = vmatprep.subr.mxu0 0.0
    %v933 = vand.u32 %v557, 4294901760
    %934 = vmatpush1.msra.mxu0 %v933
    %935 = vmatprep.subr.mxu0 0.0
    %v936 = vand.u32 %v558, 4294901760
    %937 = vmatpush1.msra.mxu0 %v936
    %938 = vmatprep.subr.mxu0 0.0
    %v939 = vand.u32 %v559, 4294901760
    %940 = vmatpush1.msra.mxu0 %v939
    %941 = vmatprep.subr.mxu0 0.0
    %v942 = vand.u32 %v560, 4294901760
    %943 = vmatpush1.msra.mxu0 %v942
    %944 = vmatprep.subr.mxu0 0.0
    %v945 = vand.u32 %v561, 4294901760
    %946 = vmatpush1.msra.mxu0 %v945
    %947 = vmatprep.subr.mxu0 0.0
    %v948 = vand.u32 %v562, 4294901760
    %949 = vmatpush1.msra.mxu0 %v948
    %950 = vmatprep.subr.mxu0 0.0
    %v951 = vand.u32 %v563, 4294901760
    %952 = vmatpush1.msra.mxu0 %v951
    %953 = vmatprep.subr.mxu0 0.0
    %v954 = vand.u32 %v564, 4294901760
    %955 = vmatpush1.msra.mxu0 %v954
    %956 = vmatprep.subr.mxu0 0.0
    %v957 = vand.u32 %v565, 4294901760
    %958 = vmatpush1.msra.mxu0 %v957
    %959 = vmatprep.subr.mxu0 0.0
    %v960 = vand.u32 %v566, 4294901760
    %961 = vmatpush1.msra.mxu0 %v960
    %962 = vmatprep.subr.mxu0 0.0
    %v963 = vand.u32 %v567, 4294901760
    %964 = vmatpush1.msra.mxu0 %v963
    %965 = vmatprep.subr.mxu0 0.0
    %v966 = vand.u32 %v568, 4294901760
    %967 = vmatpush1.msra.mxu0 %v966
    %968 = vmatprep.subr.mxu0 0.0
    %v969 = vand.u32 %v569, 4294901760
    %970 = vmatpush1.msra.mxu0 %v969
    %971 = vmatprep.subr.mxu0 0.0
    %972 = vmatpush1.msra.mxu0 0.0
    %973 = vmatprep.subr.mxu0 0.0
    %974 = vmatpush1.msra.mxu0 0.0
    %975 = vmatprep.subr.mxu0 0.0
    %976 = vmatpush1.msra.mxu0 0.0
    %977 = vmatprep.subr.mxu0 0.0
    %978 = vmatpush1.msra.mxu0 0.0
    %979 = vmatprep.subr.mxu0 0.0
    %980 = vmatpush1.msra.mxu0 0.0
    %981 = vmatprep.subr.mxu0 0.0
    %982 = vmatpush1.msra.mxu0 0.0
    %983 = vmatprep.subr.mxu0 0.0
    %984 = vmatpush1.msra.mxu0 0.0
    %985 = vmatprep.subr.mxu0 0.0
    %986 = vmatpush1.msra.mxu0 0.0
    %987 = vmatprep.subr.mxu0 0.0
    %988 = vmatpush1.msra.mxu0 0.0
    %989 = vmatprep.subr.mxu0 0.0
    %990 = vmatpush1.msra.mxu0 0.0
    %991 = vmatprep.subr.mxu0 0.0
    %992 = vmatpush1.msra.mxu0 0.0
    %993 = vmatprep.subr.mxu0 0.0
    %994 = vmatpush1.msra.mxu0 0.0
    %995 = vmatprep.subr.mxu0 0.0
    %996 = vmatpush1.msra.mxu0 0.0
    %997 = vmatprep.subr.mxu0 0.0
    %998 = vmatpush1.msra.mxu0 0.0
    %999 = vmatprep.subr.mxu0 0.0
    %1000 = vmatpush1.msra.mxu0 0.0
    %1001 = vmatprep.subr.mxu0 0.0
    %1002 = vmatpush1.msra.mxu0 0.0
    %1003 = vmatprep.mubr.f32.mxu0 0.0
    %v1004 = vand.u32 %v553, 4294901760
    %v1005 = vsub.f32 %v553, %v1004
    %v1006 = vand.u32 %v1005, 4294901760
    %1007 = vmatmul.mubr.f32.gmra.mrb[0].mxu0 %v1006
    %v1008 = vpop.f32.mrb[0].mxu0
    %v1009 = vadd.f32 %v920, %v1008
    %v1010 = vpop.f32.mrb[0].mxu0
    %1011 = vdwg.mxu0
    %1012 = vmatprep.subr.mxu0 0.0
    %v1013 = vand.u32 %v554, 4294901760
    %v1014 = vsub.f32 %v554, %v1013
    %v1015 = vand.u32 %v1014, 4294901760
    %1016 = vmatpush1.msra.mxu0 %v1015
    %1017 = vmatprep.subr.mxu0 0.0
    %v1018 = vand.u32 %v555, 4294901760
    %v1019 = vsub.f32 %v555, %v1018
    %v1020 = vand.u32 %v1019, 4294901760
    %1021 = vmatpush1.msra.mxu0 %v1020
    %1022 = vmatprep.subr.mxu0 0.0
    %v1023 = vand.u32 %v556, 4294901760
    %v1024 = vsub.f32 %v556, %v1023
    %v1025 = vand.u32 %v1024, 4294901760
    %1026 = vmatpush1.msra.mxu0 %v1025
    %1027 = vmatprep.subr.mxu0 0.0
    %v1028 = vand.u32 %v557, 4294901760
    %v1029 = vsub.f32 %v557, %v1028
    %v1030 = vand.u32 %v1029, 4294901760
    %1031 = vmatpush1.msra.mxu0 %v1030
    %1032 = vmatprep.subr.mxu0 0.0
    %v1033 = vand.u32 %v558, 4294901760
    %v1034 = vsub.f32 %v558, %v1033
    %v1035 = vand.u32 %v1034, 4294901760
    %1036 = vmatpush1.msra.mxu0 %v1035
    %1037 = vmatprep.subr.mxu0 0.0
    %v1038 = vand.u32 %v559, 4294901760
    %v1039 = vsub.f32 %v559, %v1038
    %v1040 = vand.u32 %v1039, 4294901760
    %1041 = vmatpush1.msra.mxu0 %v1040
    %1042 = vmatprep.subr.mxu0 0.0
    %v1043 = vand.u32 %v560, 4294901760
    %v1044 = vsub.f32 %v560, %v1043
    %v1045 = vand.u32 %v1044, 4294901760
    %1046 = vmatpush1.msra.mxu0 %v1045
    %1047 = vmatprep.subr.mxu0 0.0
    %v1048 = vand.u32 %v561, 4294901760
    %v1049 = vsub.f32 %v561, %v1048
    %v1050 = vand.u32 %v1049, 4294901760
    %1051 = vmatpush1.msra.mxu0 %v1050
    %1052 = vmatprep.subr.mxu0 0.0
    %v1053 = vand.u32 %v562, 4294901760
    %v1054 = vsub.f32 %v562, %v1053
    %v1055 = vand.u32 %v1054, 4294901760
    %1056 = vmatpush1.msra.mxu0 %v1055
    %1057 = vmatprep.subr.mxu0 0.0
    %v1058 = vand.u32 %v563, 4294901760
    %v1059 = vsub.f32 %v563, %v1058
    %v1060 = vand.u32 %v1059, 4294901760
    %1061 = vmatpush1.msra.mxu0 %v1060
    %1062 = vmatprep.subr.mxu0 0.0
    %v1063 = vand.u32 %v564, 4294901760
    %v1064 = vsub.f32 %v564, %v1063
    %v1065 = vand.u32 %v1064, 4294901760
    %1066 = vmatpush1.msra.mxu0 %v1065
    %1067 = vmatprep.subr.mxu0 0.0
    %v1068 = vand.u32 %v565, 4294901760
    %v1069 = vsub.f32 %v565, %v1068
    %v1070 = vand.u32 %v1069, 4294901760
    %1071 = vmatpush1.msra.mxu0 %v1070
    %1072 = vmatprep.subr.mxu0 0.0
    %v1073 = vand.u32 %v566, 4294901760
    %v1074 = vsub.f32 %v566, %v1073
    %v1075 = vand.u32 %v1074, 4294901760
    %1076 = vmatpush1.msra.mxu0 %v1075
    %1077 = vmatprep.subr.mxu0 0.0
    %v1078 = vand.u32 %v567, 4294901760
    %v1079 = vsub.f32 %v567, %v1078
    %v1080 = vand.u32 %v1079, 4294901760
    %1081 = vmatpush1.msra.mxu0 %v1080
    %1082 = vmatprep.subr.mxu0 0.0
    %v1083 = vand.u32 %v568, 4294901760
    %v1084 = vsub.f32 %v568, %v1083
    %v1085 = vand.u32 %v1084, 4294901760
    %1086 = vmatpush1.msra.mxu0 %v1085
    %1087 = vmatprep.subr.mxu0 0.0
    %v1088 = vand.u32 %v569, 4294901760
    %v1089 = vsub.f32 %v569, %v1088
    %v1090 = vand.u32 %v1089, 4294901760
    %1091 = vmatpush1.msra.mxu0 %v1090
    %1092 = vmatprep.subr.mxu0 0.0
    %1093 = vmatpush1.msra.mxu0 0.0
    %1094 = vmatprep.subr.mxu0 0.0
    %1095 = vmatpush1.msra.mxu0 0.0
    %1096 = vmatprep.subr.mxu0 0.0
    %1097 = vmatpush1.msra.mxu0 0.0
    %1098 = vmatprep.subr.mxu0 0.0
    %1099 = vmatpush1.msra.mxu0 0.0
    %1100 = vmatprep.subr.mxu0 0.0
    %1101 = vmatpush1.msra.mxu0 0.0
    %1102 = vmatprep.subr.mxu0 0.0
    %1103 = vmatpush1.msra.mxu0 0.0
    %1104 = vmatprep.subr.mxu0 0.0
    %1105 = vmatpush1.msra.mxu0 0.0
    %1106 = vmatprep.subr.mxu0 0.0
    %1107 = vmatpush1.msra.mxu0 0.0
    %1108 = vmatprep.subr.mxu0 0.0
    %1109 = vmatpush1.msra.mxu0 0.0
    %1110 = vmatprep.subr.mxu0 0.0
    %1111 = vmatpush1.msra.mxu0 0.0
    %1112 = vmatprep.subr.mxu0 0.0
    %1113 = vmatpush1.msra.mxu0 0.0
    %1114 = vmatprep.subr.mxu0 0.0
    %1115 = vmatpush1.msra.mxu0 0.0
    %1116 = vmatprep.subr.mxu0 0.0
    %1117 = vmatpush1.msra.mxu0 0.0
    %1118 = vmatprep.subr.mxu0 0.0
    %1119 = vmatpush1.msra.mxu0 0.0
    %1120 = vmatprep.subr.mxu0 0.0
    %1121 = vmatpush1.msra.mxu0 0.0
    %1122 = vmatprep.subr.mxu0 0.0
    %1123 = vmatpush1.msra.mxu0 0.0
    %1124 = vmatprep.mubr.f32.mxu0 0.0
    %v1125 = vand.u32 %v553, 4294901760
    %1126 = vmatmul.mubr.f32.gmra.mrb[0].mxu0 %v1125
    %v1127 = vpop.f32.mrb[0].mxu0
    %v1128 = vadd.f32 %v1009, %v1127
    %v1129 = vpop.f32.mrb[0].mxu0
    %1130 = vdwg.mxu0
    %1131 = vmatprep.subr.mxu0 0.0
    %v1132 = vand.u32 %v554, 4294901760
    %1133 = vmatpush1.msra.mxu0 %v1132
    %1134 = vmatprep.subr.mxu0 0.0
    %v1135 = vand.u32 %v555, 4294901760
    %1136 = vmatpush1.msra.mxu0 %v1135
    %1137 = vmatprep.subr.mxu0 0.0
    %v1138 = vand.u32 %v556, 4294901760
    %1139 = vmatpush1.msra.mxu0 %v1138
    %1140 = vmatprep.subr.mxu0 0.0
    %v1141 = vand.u32 %v557, 4294901760
    %1142 = vmatpush1.msra.mxu0 %v1141
    %1143 = vmatprep.subr.mxu0 0.0
    %v1144 = vand.u32 %v558, 4294901760
    %1145 = vmatpush1.msra.mxu0 %v1144
    %1146 = vmatprep.subr.mxu0 0.0
    %v1147 = vand.u32 %v559, 4294901760
    %1148 = vmatpush1.msra.mxu0 %v1147
    %1149 = vmatprep.subr.mxu0 0.0
    %v1150 = vand.u32 %v560, 4294901760
    %1151 = vmatpush1.msra.mxu0 %v1150
    %1152 = vmatprep.subr.mxu0 0.0
    %v1153 = vand.u32 %v561, 4294901760
    %1154 = vmatpush1.msra.mxu0 %v1153
    %1155 = vmatprep.subr.mxu0 0.0
    %v1156 = vand.u32 %v562, 4294901760
    %1157 = vmatpush1.msra.mxu0 %v1156
    %1158 = vmatprep.subr.mxu0 0.0
    %v1159 = vand.u32 %v563, 4294901760
    %1160 = vmatpush1.msra.mxu0 %v1159
    %1161 = vmatprep.subr.mxu0 0.0
    %v1162 = vand.u32 %v564, 4294901760
    %1163 = vmatpush1.msra.mxu0 %v1162
    %1164 = vmatprep.subr.mxu0 0.0
    %v1165 = vand.u32 %v565, 4294901760
    %1166 = vmatpush1.msra.mxu0 %v1165
    %1167 = vmatprep.subr.mxu0 0.0
    %v1168 = vand.u32 %v566, 4294901760
    %1169 = vmatpush1.msra.mxu0 %v1168
    %1170 = vmatprep.subr.mxu0 0.0
    %v1171 = vand.u32 %v567, 4294901760
    %1172 = vmatpush1.msra.mxu0 %v1171
    %1173 = vmatprep.subr.mxu0 0.0
    %v1174 = vand.u32 %v568, 4294901760
    %1175 = vmatpush1.msra.mxu0 %v1174
    %1176 = vmatprep.subr.mxu0 0.0
    %v1177 = vand.u32 %v569, 4294901760
    %1178 = vmatpush1.msra.mxu0 %v1177
    %1179 = vmatprep.subr.mxu0 0.0
    %1180 = vmatpush1.msra.mxu0 0.0
    %1181 = vmatprep.subr.mxu0 0.0
    %1182 = vmatpush1.msra.mxu0 0.0
    %1183 = vmatprep.subr.mxu0 0.0
    %1184 = vmatpush1.msra.mxu0 0.0
    %1185 = vmatprep.subr.mxu0 0.0
    %1186 = vmatpush1.msra.mxu0 0.0
    %1187 = vmatprep.subr.mxu0 0.0
    %1188 = vmatpush1.msra.mxu0 0.0
    %1189 = vmatprep.subr.mxu0 0.0
    %1190 = vmatpush1.msra.mxu0 0.0
    %1191 = vmatprep.subr.mxu0 0.0
    %1192 = vmatpush1.msra.mxu0 0.0
    %1193 = vmatprep.subr.mxu0 0.0
    %1194 = vmatpush1.msra.mxu0 0.0
    %1195 = vmatprep.subr.mxu0 0.0
    %1196 = vmatpush1.msra.mxu0 0.0
    %1197 = vmatprep.subr.mxu0 0.0
    %1198 = vmatpush1.msra.mxu0 0.0
    %1199 = vmatprep.subr.mxu0 0.0
    %1200 = vmatpush1.msra.mxu0 0.0
    %1201 = vmatprep.subr.mxu0 0.0
    %1202 = vmatpush1.msra.mxu0 0.0
    %1203 = vmatprep.subr.mxu0 0.0
    %1204 = vmatpush1.msra.mxu0 0.0
    %1205 = vmatprep.subr.mxu0 0.0
    %1206 = vmatpush1.msra.mxu0 0.0
    %1207 = vmatprep.subr.mxu0 0.0
    %1208 = vmatpush1.msra.mxu0 0.0
    %1209 = vmatprep.subr.mxu0 0.0
    %1210 = vmatpush1.msra.mxu0 0.0
    %1211 = vmatprep.mubr.f32.mxu0 0.0
    %v1212 = vand.u32 %v553, 4294901760
    %1213 = vmatmul.mubr.f32.gmra.mrb[0].mxu0 %v1212
    %v1214 = vpop.f32.mrb[0].mxu0
    %v1215 = vadd.f32 %v1128, %v1214
    %v1216 = vpop.f32.mrb[0].mxu0
    %1217 = vdwg.mxu0
    %v1218 = vmax.f32 %v1215, 0.0
    %v1219 = vld [vmem:[#allocation8] sm:$0xff]
    %v1220 = vld [vmem:[#allocation8 + $0x8] sm:$0xff]
    %v1221 = vld [vmem:[#allocation8 + $0x10] sm:$0xff]
    %v1222 = vld [vmem:[#allocation8 + $0x18] sm:$0xff]
    %v1223 = vld [vmem:[#allocation8 + $0x20] sm:$0xff]
    %v1224 = vld [vmem:[#allocation8 + $0x28] sm:$0xff]
    %v1225 = vld [vmem:[#allocation8 + $0x30] sm:$0xff]
    %v1226 = vld [vmem:[#allocation8 + $0x38] sm:$0xff]
    %v1227 = vld [vmem:[#allocation8 + $0x40] sm:$0xff]
    %v1228 = vld [vmem:[#allocation8 + $0x48] sm:$0xff]
    %v1229 = vld [vmem:[#allocation8 + $0x50] sm:$0xff]
    %v1230 = vld [vmem:[#allocation8 + $0x58] sm:$0xff]
    %v1231 = vld [vmem:[#allocation8 + $0x60] sm:$0xff]
    %v1232 = vld [vmem:[#allocation8 + $0x68] sm:$0xff]
    %v1233 = vld [vmem:[#allocation8 + $0x70] sm:$0xff]
    %v1234 = vld [vmem:[#allocation8 + $0x78] sm:$0xff]
    %v1235 = vld [vmem:[%s6] sm:$0x1]
    %v1237 = vlaneseq
    %v1238 = vshrl.u32 %v1237, 7
    %v1239 = vsub.s32 0, %v1238
    %v1240 = vrot.slane %v1235, %v1239
    %1242 = vmatprep.subr.mxu0 0.0
    %v1243 = vand.u32 %v1219, 4294901760
    %1244 = vmatpush1.msra.mxu0 %v1243
    %1245 = vmatprep.subr.mxu0 0.0
    %v1246 = vand.u32 %v1220, 4294901760
    %1247 = vmatpush1.msra.mxu0 %v1246
    %1248 = vmatprep.subr.mxu0 0.0
    %v1249 = vand.u32 %v1221, 4294901760
    %1250 = vmatpush1.msra.mxu0 %v1249
    %1251 = vmatprep.subr.mxu0 0.0
    %v1252 = vand.u32 %v1222, 4294901760
    %1253 = vmatpush1.msra.mxu0 %v1252
    %1254 = vmatprep.subr.mxu0 0.0
    %v1255 = vand.u32 %v1223, 4294901760
    %1256 = vmatpush1.msra.mxu0 %v1255
    %1257 = vmatprep.subr.mxu0 0.0
    %v1258 = vand.u32 %v1224, 4294901760
    %1259 = vmatpush1.msra.mxu0 %v1258
    %1260 = vmatprep.subr.mxu0 0.0
    %v1261 = vand.u32 %v1225, 4294901760
    %1262 = vmatpush1.msra.mxu0 %v1261
    %1263 = vmatprep.subr.mxu0 0.0
    %v1264 = vand.u32 %v1226, 4294901760
    %1265 = vmatpush1.msra.mxu0 %v1264
    %1266 = vmatprep.subr.mxu0 0.0
    %v1267 = vand.u32 %v1227, 4294901760
    %1268 = vmatpush1.msra.mxu0 %v1267
    %1269 = vmatprep.subr.mxu0 0.0
    %v1270 = vand.u32 %v1228, 4294901760
    %1271 = vmatpush1.msra.mxu0 %v1270
    %1272 = vmatprep.subr.mxu0 0.0
    %v1273 = vand.u32 %v1229, 4294901760
    %1274 = vmatpush1.msra.mxu0 %v1273
    %1275 = vmatprep.subr.mxu0 0.0
    %v1276 = vand.u32 %v1230, 4294901760
    %1277 = vmatpush1.msra.mxu0 %v1276
    %1278 = vmatprep.subr.mxu0 0.0
    %v1279 = vand.u32 %v1231, 4294901760
    %1280 = vmatpush1.msra.mxu0 %v1279
    %1281 = vmatprep.subr.mxu0 0.0
    %v1282 = vand.u32 %v1232, 4294901760
    %1283 = vmatpush1.msra.mxu0 %v1282
    %1284 = vmatprep.subr.mxu0 0.0
    %v1285 = vand.u32 %v1233, 4294901760
    %1286 = vmatpush1.msra.mxu0 %v1285
    %1287 = vmatprep.subr.mxu0 0.0
    %v1288 = vand.u32 %v1234, 4294901760
    %1289 = vmatpush1.msra.mxu0 %v1288
    %1290 = vmatprep.subr.mxu0 0.0
    %1291 = vmatpush1.msra.mxu0 0.0
    %1292 = vmatprep.subr.mxu0 0.0
    %1293 = vmatpush1.msra.mxu0 0.0
    %1294 = vmatprep.subr.mxu0 0.0
    %1295 = vmatpush1.msra.mxu0 0.0
    %1296 = vmatprep.subr.mxu0 0.0
    %1297 = vmatpush1.msra.mxu0 0.0
    %1298 = vmatprep.subr.mxu0 0.0
    %1299 = vmatpush1.msra.mxu0 0.0
    %1300 = vmatprep.subr.mxu0 0.0
    %1301 = vmatpush1.msra.mxu0 0.0
    %1302 = vmatprep.subr.mxu0 0.0
    %1303 = vmatpush1.msra.mxu0 0.0
    %1304 = vmatprep.subr.mxu0 0.0
    %1305 = vmatpush1.msra.mxu0 0.0
    %1306 = vmatprep.subr.mxu0 0.0
    %1307 = vmatpush1.msra.mxu0 0.0
    %1308 = vmatprep.subr.mxu0 0.0
    %1309 = vmatpush1.msra.mxu0 0.0
    %1310 = vmatprep.subr.mxu0 0.0
    %1311 = vmatpush1.msra.mxu0 0.0
    %1312 = vmatprep.subr.mxu0 0.0
    %1313 = vmatpush1.msra.mxu0 0.0
    %1314 = vmatprep.subr.mxu0 0.0
    %1315 = vmatpush1.msra.mxu0 0.0
    %1316 = vmatprep.subr.mxu0 0.0
    %1317 = vmatpush1.msra.mxu0 0.0
    %1318 = vmatprep.subr.mxu0 0.0
    %1319 = vmatpush1.msra.mxu0 0.0
    %1320 = vmatprep.subr.mxu0 0.0
    %1321 = vmatpush1.msra.mxu0 0.0
    %1322 = vmatprep.mubr.f32.mxu0 0.0
    %v1323 = vand.u32 %v1218, 4294901760
    %v1324 = vsub.f32 %v1218, %v1323
    %v1325 = vand.u32 %v1324, 4294901760
    %v1326 = vsub.f32 %v1324, %v1325
    %v1327 = vand.u32 %v1326, 4294901760
    %1328 = vmatmul.mubr.f32.gmra.mrb[0].mxu0 %v1327
    %v1329 = vpop.f32.mrb[0].mxu0
    %v1330 = vadd.f32 %v1240, %v1329
    %v1331 = vpop.f32.mrb[0].mxu0
    %1332 = vdwg.mxu0
    %1333 = vmatprep.subr.mxu0 0.0
    %v1334 = vand.u32 %v1219, 4294901760
    %v1335 = vsub.f32 %v1219, %v1334
    %v1336 = vand.u32 %v1335, 4294901760
    %v1337 = vsub.f32 %v1335, %v1336
    %v1338 = vand.u32 %v1337, 4294901760
    %1339 = vmatpush1.msra.mxu0 %v1338
    %1340 = vmatprep.subr.mxu0 0.0
    %v1341 = vand.u32 %v1220, 4294901760
    %v1342 = vsub.f32 %v1220, %v1341
    %v1343 = vand.u32 %v1342, 4294901760
    %v1344 = vsub.f32 %v1342, %v1343
    %v1345 = vand.u32 %v1344, 4294901760
    %1346 = vmatpush1.msra.mxu0 %v1345
    %1347 = vmatprep.subr.mxu0 0.0
    %v1348 = vand.u32 %v1221, 4294901760
    %v1349 = vsub.f32 %v1221, %v1348
    %v1350 = vand.u32 %v1349, 4294901760
    %v1351 = vsub.f32 %v1349, %v1350
    %v1352 = vand.u32 %v1351, 4294901760
    %1353 = vmatpush1.msra.mxu0 %v1352
    %1354 = vmatprep.subr.mxu0 0.0
    %v1355 = vand.u32 %v1222, 4294901760
    %v1356 = vsub.f32 %v1222, %v1355
    %v1357 = vand.u32 %v1356, 4294901760
    %v1358 = vsub.f32 %v1356, %v1357
    %v1359 = vand.u32 %v1358, 4294901760
    %1360 = vmatpush1.msra.mxu0 %v1359
    %1361 = vmatprep.subr.mxu0 0.0
    %v1362 = vand.u32 %v1223, 4294901760
    %v1363 = vsub.f32 %v1223, %v1362
    %v1364 = vand.u32 %v1363, 4294901760
    %v1365 = vsub.f32 %v1363, %v1364
    %v1366 = vand.u32 %v1365, 4294901760
    %1367 = vmatpush1.msra.mxu0 %v1366
    %1368 = vmatprep.subr.mxu0 0.0
    %v1369 = vand.u32 %v1224, 4294901760
    %v1370 = vsub.f32 %v1224, %v1369
    %v1371 = vand.u32 %v1370, 4294901760
    %v1372 = vsub.f32 %v1370, %v1371
    %v1373 = vand.u32 %v1372, 4294901760
    %1374 = vmatpush1.msra.mxu0 %v1373
    %1375 = vmatprep.subr.mxu0 0.0
    %v1376 = vand.u32 %v1225, 4294901760
    %v1377 = vsub.f32 %v1225, %v1376
    %v1378 = vand.u32 %v1377, 4294901760
    %v1379 = vsub.f32 %v1377, %v1378
    %v1380 = vand.u32 %v1379, 4294901760
    %1381 = vmatpush1.msra.mxu0 %v1380
    %1382 = vmatprep.subr.mxu0 0.0
    %v1383 = vand.u32 %v1226, 4294901760
    %v1384 = vsub.f32 %v1226, %v1383
    %v1385 = vand.u32 %v1384, 4294901760
    %v1386 = vsub.f32 %v1384, %v1385
    %v1387 = vand.u32 %v1386, 4294901760
    %1388 = vmatpush1.msra.mxu0 %v1387
    %1389 = vmatprep.subr.mxu0 0.0
    %v1390 = vand.u32 %v1227, 4294901760
    %v1391 = vsub.f32 %v1227, %v1390
    %v1392 = vand.u32 %v1391, 4294901760
    %v1393 = vsub.f32 %v1391, %v1392
    %v1394 = vand.u32 %v1393, 4294901760
    %1395 = vmatpush1.msra.mxu0 %v1394
    %1396 = vmatprep.subr.mxu0 0.0
    %v1397 = vand.u32 %v1228, 4294901760
    %v1398 = vsub.f32 %v1228, %v1397
    %v1399 = vand.u32 %v1398, 4294901760
    %v1400 = vsub.f32 %v1398, %v1399
    %v1401 = vand.u32 %v1400, 4294901760
    %1402 = vmatpush1.msra.mxu0 %v1401
    %1403 = vmatprep.subr.mxu0 0.0
    %v1404 = vand.u32 %v1229, 4294901760
    %v1405 = vsub.f32 %v1229, %v1404
    %v1406 = vand.u32 %v1405, 4294901760
    %v1407 = vsub.f32 %v1405, %v1406
    %v1408 = vand.u32 %v1407, 4294901760
    %1409 = vmatpush1.msra.mxu0 %v1408
    %1410 = vmatprep.subr.mxu0 0.0
    %v1411 = vand.u32 %v1230, 4294901760
    %v1412 = vsub.f32 %v1230, %v1411
    %v1413 = vand.u32 %v1412, 4294901760
    %v1414 = vsub.f32 %v1412, %v1413
    %v1415 = vand.u32 %v1414, 4294901760
    %1416 = vmatpush1.msra.mxu0 %v1415
    %1417 = vmatprep.subr.mxu0 0.0
    %v1418 = vand.u32 %v1231, 4294901760
    %v1419 = vsub.f32 %v1231, %v1418
    %v1420 = vand.u32 %v1419, 4294901760
    %v1421 = vsub.f32 %v1419, %v1420
    %v1422 = vand.u32 %v1421, 4294901760
    %1423 = vmatpush1.msra.mxu0 %v1422
    %1424 = vmatprep.subr.mxu0 0.0
    %v1425 = vand.u32 %v1232, 4294901760
    %v1426 = vsub.f32 %v1232, %v1425
    %v1427 = vand.u32 %v1426, 4294901760
    %v1428 = vsub.f32 %v1426, %v1427
    %v1429 = vand.u32 %v1428, 4294901760
    %1430 = vmatpush1.msra.mxu0 %v1429
    %1431 = vmatprep.subr.mxu0 0.0
    %v1432 = vand.u32 %v1233, 4294901760
    %v1433 = vsub.f32 %v1233, %v1432
    %v1434 = vand.u32 %v1433, 4294901760
    %v1435 = vsub.f32 %v1433, %v1434
    %v1436 = vand.u32 %v1435, 4294901760
    %1437 = vmatpush1.msra.mxu0 %v1436
    %1438 = vmatprep.subr.mxu0 0.0
    %v1439 = vand.u32 %v1234, 4294901760
    %v1440 = vsub.f32 %v1234, %v1439
    %v1441 = vand.u32 %v1440, 4294901760
    %v1442 = vsub.f32 %v1440, %v1441
    %v1443 = vand.u32 %v1442, 4294901760
    %1444 = vmatpush1.msra.mxu0 %v1443
    %1445 = vmatprep.subr.mxu0 0.0
    %1446 = vmatpush1.msra.mxu0 0.0
    %1447 = vmatprep.subr.mxu0 0.0
    %1448 = vmatpush1.msra.mxu0 0.0
    %1449 = vmatprep.subr.mxu0 0.0
    %1450 = vmatpush1.msra.mxu0 0.0
    %1451 = vmatprep.subr.mxu0 0.0
    %1452 = vmatpush1.msra.mxu0 0.0
    %1453 = vmatprep.subr.mxu0 0.0
    %1454 = vmatpush1.msra.mxu0 0.0
    %1455 = vmatprep.subr.mxu0 0.0
    %1456 = vmatpush1.msra.mxu0 0.0
    %1457 = vmatprep.subr.mxu0 0.0
    %1458 = vmatpush1.msra.mxu0 0.0
    %1459 = vmatprep.subr.mxu0 0.0
    %1460 = vmatpush1.msra.mxu0 0.0
    %1461 = vmatprep.subr.mxu0 0.0
    %1462 = vmatpush1.msra.mxu0 0.0
    %1463 = vmatprep.subr.mxu0 0.0
    %1464 = vmatpush1.msra.mxu0 0.0
    %1465 = vmatprep.subr.mxu0 0.0
    %1466 = vmatpush1.msra.mxu0 0.0
    %1467 = vmatprep.subr.mxu0 0.0
    %1468 = vmatpush1.msra.mxu0 0.0
    %1469 = vmatprep.subr.mxu0 0.0
    %1470 = vmatpush1.msra.mxu0 0.0
    %1471 = vmatprep.subr.mxu0 0.0
    %1472 = vmatpush1.msra.mxu0 0.0
    %1473 = vmatprep.subr.mxu0 0.0
    %1474 = vmatpush1.msra.mxu0 0.0
    %1475 = vmatprep.subr.mxu0 0.0
    %1476 = vmatpush1.msra.mxu0 0.0
    %1477 = vmatprep.mubr.f32.mxu0 0.0
    %v1478 = vand.u32 %v1218, 4294901760
    %1479 = vmatmul.mubr.f32.gmra.mrb[0].mxu0 %v1478
    %v1480 = vpop.f32.mrb[0].mxu0
    %v1481 = vadd.f32 %v1330, %v1480
    %v1482 = vpop.f32.mrb[0].mxu0
    %1483 = vdwg.mxu0
    %1484 = vmatprep.subr.mxu0 0.0
    %v1485 = vand.u32 %v1219, 4294901760
    %v1486 = vsub.f32 %v1219, %v1485
    %1487 = vmatpush1.msra.mxu0 %v1486
    %1488 = vmatprep.subr.mxu0 0.0
    %v1489 = vand.u32 %v1220, 4294901760
    %v1490 = vsub.f32 %v1220, %v1489
    %1491 = vmatpush1.msra.mxu0 %v1490
    %1492 = vmatprep.subr.mxu0 0.0
    %v1493 = vand.u32 %v1221, 4294901760
    %v1494 = vsub.f32 %v1221, %v1493
    %1495 = vmatpush1.msra.mxu0 %v1494
    %1496 = vmatprep.subr.mxu0 0.0
    %v1497 = vand.u32 %v1222, 4294901760
    %v1498 = vsub.f32 %v1222, %v1497
    %1499 = vmatpush1.msra.mxu0 %v1498
    %1500 = vmatprep.subr.mxu0 0.0
    %v1501 = vand.u32 %v1223, 4294901760
    %v1502 = vsub.f32 %v1223, %v1501
    %1503 = vmatpush1.msra.mxu0 %v1502
    %1504 = vmatprep.subr.mxu0 0.0
    %v1505 = vand.u32 %v1224, 4294901760
    %v1506 = vsub.f32 %v1224, %v1505
    %1507 = vmatpush1.msra.mxu0 %v1506
    %1508 = vmatprep.subr.mxu0 0.0
    %v1509 = vand.u32 %v1225, 4294901760
    %v1510 = vsub.f32 %v1225, %v1509
    %1511 = vmatpush1.msra.mxu0 %v1510
    %1512 = vmatprep.subr.mxu0 0.0
    %v1513 = vand.u32 %v1226, 4294901760
    %v1514 = vsub.f32 %v1226, %v1513
    %1515 = vmatpush1.msra.mxu0 %v1514
    %1516 = vmatprep.subr.mxu0 0.0
    %v1517 = vand.u32 %v1227, 4294901760
    %v1518 = vsub.f32 %v1227, %v1517
    %1519 = vmatpush1.msra.mxu0 %v1518
    %1520 = vmatprep.subr.mxu0 0.0
    %v1521 = vand.u32 %v1228, 4294901760
    %v1522 = vsub.f32 %v1228, %v1521
    %1523 = vmatpush1.msra.mxu0 %v1522
    %1524 = vmatprep.subr.mxu0 0.0
    %v1525 = vand.u32 %v1229, 4294901760
    %v1526 = vsub.f32 %v1229, %v1525
    %1527 = vmatpush1.msra.mxu0 %v1526
    %1528 = vmatprep.subr.mxu0 0.0
    %v1529 = vand.u32 %v1230, 4294901760
    %v1530 = vsub.f32 %v1230, %v1529
    %1531 = vmatpush1.msra.mxu0 %v1530
    %1532 = vmatprep.subr.mxu0 0.0
    %v1533 = vand.u32 %v1231, 4294901760
    %v1534 = vsub.f32 %v1231, %v1533
    %1535 = vmatpush1.msra.mxu0 %v1534
    %1536 = vmatprep.subr.mxu0 0.0
    %v1537 = vand.u32 %v1232, 4294901760
    %v1538 = vsub.f32 %v1232, %v1537
    %1539 = vmatpush1.msra.mxu0 %v1538
    %1540 = vmatprep.subr.mxu0 0.0
    %v1541 = vand.u32 %v1233, 4294901760
    %v1542 = vsub.f32 %v1233, %v1541
    %1543 = vmatpush1.msra.mxu0 %v1542
    %1544 = vmatprep.subr.mxu0 0.0
    %v1545 = vand.u32 %v1234, 4294901760
    %v1546 = vsub.f32 %v1234, %v1545
    %1547 = vmatpush1.msra.mxu0 %v1546
    %1548 = vmatprep.subr.mxu0 0.0
    %1549 = vmatpush1.msra.mxu0 0.0
    %1550 = vmatprep.subr.mxu0 0.0
    %1551 = vmatpush1.msra.mxu0 0.0
    %1552 = vmatprep.subr.mxu0 0.0
    %1553 = vmatpush1.msra.mxu0 0.0
    %1554 = vmatprep.subr.mxu0 0.0
    %1555 = vmatpush1.msra.mxu0 0.0
    %1556 = vmatprep.subr.mxu0 0.0
    %1557 = vmatpush1.msra.mxu0 0.0
    %1558 = vmatprep.subr.mxu0 0.0
    %1559 = vmatpush1.msra.mxu0 0.0
    %1560 = vmatprep.subr.mxu0 0.0
    %1561 = vmatpush1.msra.mxu0 0.0
    %1562 = vmatprep.subr.mxu0 0.0
    %1563 = vmatpush1.msra.mxu0 0.0
    %1564 = vmatprep.subr.mxu0 0.0
    %1565 = vmatpush1.msra.mxu0 0.0
    %1566 = vmatprep.subr.mxu0 0.0
    %1567 = vmatpush1.msra.mxu0 0.0
    %1568 = vmatprep.subr.mxu0 0.0
    %1569 = vmatpush1.msra.mxu0 0.0
    %1570 = vmatprep.subr.mxu0 0.0
    %1571 = vmatpush1.msra.mxu0 0.0
    %1572 = vmatprep.subr.mxu0 0.0
    %1573 = vmatpush1.msra.mxu0 0.0
    %1574 = vmatprep.subr.mxu0 0.0
    %1575 = vmatpush1.msra.mxu0 0.0
    %1576 = vmatprep.subr.mxu0 0.0
    %1577 = vmatpush1.msra.mxu0 0.0
    %1578 = vmatprep.subr.mxu0 0.0
    %1579 = vmatpush1.msra.mxu0 0.0
    %1580 = vmatprep.mubr.f32.mxu0 0.0
    %v1581 = vand.u32 %v1218, 4294901760
    %v1582 = vsub.f32 %v1218, %v1581
    %1583 = vmatmul.mubr.f32.gmra.mrb[0].mxu0 %v1582
    %v1584 = vpop.f32.mrb[0].mxu0
    %v1585 = vadd.f32 %v1481, %v1584
    %v1586 = vpop.f32.mrb[0].mxu0
    %1587 = vdwg.mxu0
    %1588 = vmatprep.subr.mxu0 0.0
    %v1589 = vand.u32 %v1219, 4294901760
    %1590 = vmatpush1.msra.mxu0 %v1589
    %1591 = vmatprep.subr.mxu0 0.0
    %v1592 = vand.u32 %v1220, 4294901760
    %1593 = vmatpush1.msra.mxu0 %v1592
    %1594 = vmatprep.subr.mxu0 0.0
    %v1595 = vand.u32 %v1221, 4294901760
    %1596 = vmatpush1.msra.mxu0 %v1595
    %1597 = vmatprep.subr.mxu0 0.0
    %v1598 = vand.u32 %v1222, 4294901760
    %1599 = vmatpush1.msra.mxu0 %v1598
    %1600 = vmatprep.subr.mxu0 0.0
    %v1601 = vand.u32 %v1223, 4294901760
    %1602 = vmatpush1.msra.mxu0 %v1601
    %1603 = vmatprep.subr.mxu0 0.0
    %v1604 = vand.u32 %v1224, 4294901760
    %1605 = vmatpush1.msra.mxu0 %v1604
    %1606 = vmatprep.subr.mxu0 0.0
    %v1607 = vand.u32 %v1225, 4294901760
    %1608 = vmatpush1.msra.mxu0 %v1607
    %1609 = vmatprep.subr.mxu0 0.0
    %v1610 = vand.u32 %v1226, 4294901760
    %1611 = vmatpush1.msra.mxu0 %v1610
    %1612 = vmatprep.subr.mxu0 0.0
    %v1613 = vand.u32 %v1227, 4294901760
    %1614 = vmatpush1.msra.mxu0 %v1613
    %1615 = vmatprep.subr.mxu0 0.0
    %v1616 = vand.u32 %v1228, 4294901760
    %1617 = vmatpush1.msra.mxu0 %v1616
    %1618 = vmatprep.subr.mxu0 0.0
    %v1619 = vand.u32 %v1229, 4294901760
    %1620 = vmatpush1.msra.mxu0 %v1619
    %1621 = vmatprep.subr.mxu0 0.0
    %v1622 = vand.u32 %v1230, 4294901760
    %1623 = vmatpush1.msra.mxu0 %v1622
    %1624 = vmatprep.subr.mxu0 0.0
    %v1625 = vand.u32 %v1231, 4294901760
    %1626 = vmatpush1.msra.mxu0 %v1625
    %1627 = vmatprep.subr.mxu0 0.0
    %v1628 = vand.u32 %v1232, 4294901760
    %1629 = vmatpush1.msra.mxu0 %v1628
    %1630 = vmatprep.subr.mxu0 0.0
    %v1631 = vand.u32 %v1233, 4294901760
    %1632 = vmatpush1.msra.mxu0 %v1631
    %1633 = vmatprep.subr.mxu0 0.0
    %v1634 = vand.u32 %v1234, 4294901760
    %1635 = vmatpush1.msra.mxu0 %v1634
    %1636 = vmatprep.subr.mxu0 0.0
    %1637 = vmatpush1.msra.mxu0 0.0
    %1638 = vmatprep.subr.mxu0 0.0
    %1639 = vmatpush1.msra.mxu0 0.0
    %1640 = vmatprep.subr.mxu0 0.0
    %1641 = vmatpush1.msra.mxu0 0.0
    %1642 = vmatprep.subr.mxu0 0.0
    %1643 = vmatpush1.msra.mxu0 0.0
    %1644 = vmatprep.subr.mxu0 0.0
    %1645 = vmatpush1.msra.mxu0 0.0
    %1646 = vmatprep.subr.mxu0 0.0
    %1647 = vmatpush1.msra.mxu0 0.0
    %1648 = vmatprep.subr.mxu0 0.0
    %1649 = vmatpush1.msra.mxu0 0.0
    %1650 = vmatprep.subr.mxu0 0.0
    %1651 = vmatpush1.msra.mxu0 0.0
    %1652 = vmatprep.subr.mxu0 0.0
    %1653 = vmatpush1.msra.mxu0 0.0
    %1654 = vmatprep.subr.mxu0 0.0
    %1655 = vmatpush1.msra.mxu0 0.0
    %1656 = vmatprep.subr.mxu0 0.0
    %1657 = vmatpush1.msra.mxu0 0.0
    %1658 = vmatprep.subr.mxu0 0.0
    %1659 = vmatpush1.msra.mxu0 0.0
    %1660 = vmatprep.subr.mxu0 0.0
    %1661 = vmatpush1.msra.mxu0 0.0
    %1662 = vmatprep.subr.mxu0 0.0
    %1663 = vmatpush1.msra.mxu0 0.0
    %1664 = vmatprep.subr.mxu0 0.0
    %1665 = vmatpush1.msra.mxu0 0.0
    %1666 = vmatprep.subr.mxu0 0.0
    %1667 = vmatpush1.msra.mxu0 0.0
    %1668 = vmatprep.mubr.f32.mxu0 0.0
    %v1669 = vand.u32 %v1218, 4294901760
    %v1670 = vsub.f32 %v1218, %v1669
    %v1671 = vand.u32 %v1670, 4294901760
    %1672 = vmatmul.mubr.f32.gmra.mrb[0].mxu0 %v1671
    %v1673 = vpop.f32.mrb[0].mxu0
    %v1674 = vadd.f32 %v1585, %v1673
    %v1675 = vpop.f32.mrb[0].mxu0
    %1676 = vdwg.mxu0
    %1677 = vmatprep.subr.mxu0 0.0
    %v1678 = vand.u32 %v1219, 4294901760
    %v1679 = vsub.f32 %v1219, %v1678
    %v1680 = vand.u32 %v1679, 4294901760
    %1681 = vmatpush1.msra.mxu0 %v1680
    %1682 = vmatprep.subr.mxu0 0.0
    %v1683 = vand.u32 %v1220, 4294901760
    %v1684 = vsub.f32 %v1220, %v1683
    %v1685 = vand.u32 %v1684, 4294901760
    %1686 = vmatpush1.msra.mxu0 %v1685
    %1687 = vmatprep.subr.mxu0 0.0
    %v1688 = vand.u32 %v1221, 4294901760
    %v1689 = vsub.f32 %v1221, %v1688
    %v1690 = vand.u32 %v1689, 4294901760
    %1691 = vmatpush1.msra.mxu0 %v1690
    %1692 = vmatprep.subr.mxu0 0.0
    %v1693 = vand.u32 %v1222, 4294901760
    %v1694 = vsub.f32 %v1222, %v1693
    %v1695 = vand.u32 %v1694, 4294901760
    %1696 = vmatpush1.msra.mxu0 %v1695
    %1697 = vmatprep.subr.mxu0 0.0
    %v1698 = vand.u32 %v1223, 4294901760
    %v1699 = vsub.f32 %v1223, %v1698
    %v1700 = vand.u32 %v1699, 4294901760
    %1701 = vmatpush1.msra.mxu0 %v1700
    %1702 = vmatprep.subr.mxu0 0.0
    %v1703 = vand.u32 %v1224, 4294901760
    %v1704 = vsub.f32 %v1224, %v1703
    %v1705 = vand.u32 %v1704, 4294901760
    %1706 = vmatpush1.msra.mxu0 %v1705
    %1707 = vmatprep.subr.mxu0 0.0
    %v1708 = vand.u32 %v1225, 4294901760
    %v1709 = vsub.f32 %v1225, %v1708
    %v1710 = vand.u32 %v1709, 4294901760
    %1711 = vmatpush1.msra.mxu0 %v1710
    %1712 = vmatprep.subr.mxu0 0.0
    %v1713 = vand.u32 %v1226, 4294901760
    %v1714 = vsub.f32 %v1226, %v1713
    %v1715 = vand.u32 %v1714, 4294901760
    %1716 = vmatpush1.msra.mxu0 %v1715
    %1717 = vmatprep.subr.mxu0 0.0
    %v1718 = vand.u32 %v1227, 4294901760
    %v1719 = vsub.f32 %v1227, %v1718
    %v1720 = vand.u32 %v1719, 4294901760
    %1721 = vmatpush1.msra.mxu0 %v1720
    %1722 = vmatprep.subr.mxu0 0.0
    %v1723 = vand.u32 %v1228, 4294901760
    %v1724 = vsub.f32 %v1228, %v1723
    %v1725 = vand.u32 %v1724, 4294901760
    %1726 = vmatpush1.msra.mxu0 %v1725
    %1727 = vmatprep.subr.mxu0 0.0
    %v1728 = vand.u32 %v1229, 4294901760
    %v1729 = vsub.f32 %v1229, %v1728
    %v1730 = vand.u32 %v1729, 4294901760
    %1731 = vmatpush1.msra.mxu0 %v1730
    %1732 = vmatprep.subr.mxu0 0.0
    %v1733 = vand.u32 %v1230, 4294901760
    %v1734 = vsub.f32 %v1230, %v1733
    %v1735 = vand.u32 %v1734, 4294901760
    %1736 = vmatpush1.msra.mxu0 %v1735
    %1737 = vmatprep.subr.mxu0 0.0
    %v1738 = vand.u32 %v1231, 4294901760
    %v1739 = vsub.f32 %v1231, %v1738
    %v1740 = vand.u32 %v1739, 4294901760
    %1741 = vmatpush1.msra.mxu0 %v1740
    %1742 = vmatprep.subr.mxu0 0.0
    %v1743 = vand.u32 %v1232, 4294901760
    %v1744 = vsub.f32 %v1232, %v1743
    %v1745 = vand.u32 %v1744, 4294901760
    %1746 = vmatpush1.msra.mxu0 %v1745
    %1747 = vmatprep.subr.mxu0 0.0
    %v1748 = vand.u32 %v1233, 4294901760
    %v1749 = vsub.f32 %v1233, %v1748
    %v1750 = vand.u32 %v1749, 4294901760
    %1751 = vmatpush1.msra.mxu0 %v1750
    %1752 = vmatprep.subr.mxu0 0.0
    %v1753 = vand.u32 %v1234, 4294901760
    %v1754 = vsub.f32 %v1234, %v1753
    %v1755 = vand.u32 %v1754, 4294901760
    %1756 = vmatpush1.msra.mxu0 %v1755
    %1757 = vmatprep.subr.mxu0 0.0
    %1758 = vmatpush1.msra.mxu0 0.0
    %1759 = vmatprep.subr.mxu0 0.0
    %1760 = vmatpush1.msra.mxu0 0.0
    %1761 = vmatprep.subr.mxu0 0.0
    %1762 = vmatpush1.msra.mxu0 0.0
    %1763 = vmatprep.subr.mxu0 0.0
    %1764 = vmatpush1.msra.mxu0 0.0
    %1765 = vmatprep.subr.mxu0 0.0
    %1766 = vmatpush1.msra.mxu0 0.0
    %1767 = vmatprep.subr.mxu0 0.0
    %1768 = vmatpush1.msra.mxu0 0.0
    %1769 = vmatprep.subr.mxu0 0.0
    %1770 = vmatpush1.msra.mxu0 0.0
    %1771 = vmatprep.subr.mxu0 0.0
    %1772 = vmatpush1.msra.mxu0 0.0
    %1773 = vmatprep.subr.mxu0 0.0
    %1774 = vmatpush1.msra.mxu0 0.0
    %1775 = vmatprep.subr.mxu0 0.0
    %1776 = vmatpush1.msra.mxu0 0.0
    %1777 = vmatprep.subr.mxu0 0.0
    %1778 = vmatpush1.msra.mxu0 0.0
    %1779 = vmatprep.subr.mxu0 0.0
    %1780 = vmatpush1.msra.mxu0 0.0
    %1781 = vmatprep.subr.mxu0 0.0
    %1782 = vmatpush1.msra.mxu0 0.0
    %1783 = vmatprep.subr.mxu0 0.0
    %1784 = vmatpush1.msra.mxu0 0.0
    %1785 = vmatprep.subr.mxu0 0.0
    %1786 = vmatpush1.msra.mxu0 0.0
    %1787 = vmatprep.subr.mxu0 0.0
    %1788 = vmatpush1.msra.mxu0 0.0
    %1789 = vmatprep.mubr.f32.mxu0 0.0
    %v1790 = vand.u32 %v1218, 4294901760
    %1791 = vmatmul.mubr.f32.gmra.mrb[0].mxu0 %v1790
    %v1792 = vpop.f32.mrb[0].mxu0
    %v1793 = vadd.f32 %v1674, %v1792
    %v1794 = vpop.f32.mrb[0].mxu0
    %1795 = vdwg.mxu0
    %1796 = vmatprep.subr.mxu0 0.0
    %v1797 = vand.u32 %v1219, 4294901760
    %1798 = vmatpush1.msra.mxu0 %v1797
    %1799 = vmatprep.subr.mxu0 0.0
    %v1800 = vand.u32 %v1220, 4294901760
    %1801 = vmatpush1.msra.mxu0 %v1800
    %1802 = vmatprep.subr.mxu0 0.0
    %v1803 = vand.u32 %v1221, 4294901760
    %1804 = vmatpush1.msra.mxu0 %v1803
    %1805 = vmatprep.subr.mxu0 0.0
    %v1806 = vand.u32 %v1222, 4294901760
    %1807 = vmatpush1.msra.mxu0 %v1806
    %1808 = vmatprep.subr.mxu0 0.0
    %v1809 = vand.u32 %v1223, 4294901760
    %1810 = vmatpush1.msra.mxu0 %v1809
    %1811 = vmatprep.subr.mxu0 0.0
    %v1812 = vand.u32 %v1224, 4294901760
    %1813 = vmatpush1.msra.mxu0 %v1812
    %1814 = vmatprep.subr.mxu0 0.0
    %v1815 = vand.u32 %v1225, 4294901760
    %1816 = vmatpush1.msra.mxu0 %v1815
    %1817 = vmatprep.subr.mxu0 0.0
    %v1818 = vand.u32 %v1226, 4294901760
    %1819 = vmatpush1.msra.mxu0 %v1818
    %1820 = vmatprep.subr.mxu0 0.0
    %v1821 = vand.u32 %v1227, 4294901760
    %1822 = vmatpush1.msra.mxu0 %v1821
    %1823 = vmatprep.subr.mxu0 0.0
    %v1824 = vand.u32 %v1228, 4294901760
    %1825 = vmatpush1.msra.mxu0 %v1824
    %1826 = vmatprep.subr.mxu0 0.0
    %v1827 = vand.u32 %v1229, 4294901760
    %1828 = vmatpush1.msra.mxu0 %v1827
    %1829 = vmatprep.subr.mxu0 0.0
    %v1830 = vand.u32 %v1230, 4294901760
    %1831 = vmatpush1.msra.mxu0 %v1830
    %1832 = vmatprep.subr.mxu0 0.0
    %v1833 = vand.u32 %v1231, 4294901760
    %1834 = vmatpush1.msra.mxu0 %v1833
    %1835 = vmatprep.subr.mxu0 0.0
    %v1836 = vand.u32 %v1232, 4294901760
    %1837 = vmatpush1.msra.mxu0 %v1836
    %1838 = vmatprep.subr.mxu0 0.0
    %v1839 = vand.u32 %v1233, 4294901760
    %1840 = vmatpush1.msra.mxu0 %v1839
    %1841 = vmatprep.subr.mxu0 0.0
    %v1842 = vand.u32 %v1234, 4294901760
    %1843 = vmatpush1.msra.mxu0 %v1842
    %1844 = vmatprep.subr.mxu0 0.0
    %1845 = vmatpush1.msra.mxu0 0.0
    %1846 = vmatprep.subr.mxu0 0.0
    %1847 = vmatpush1.msra.mxu0 0.0
    %1848 = vmatprep.subr.mxu0 0.0
    %1849 = vmatpush1.msra.mxu0 0.0
    %1850 = vmatprep.subr.mxu0 0.0
    %1851 = vmatpush1.msra.mxu0 0.0
    %1852 = vmatprep.subr.mxu0 0.0
    %1853 = vmatpush1.msra.mxu0 0.0
    %1854 = vmatprep.subr.mxu0 0.0
    %1855 = vmatpush1.msra.mxu0 0.0
    %1856 = vmatprep.subr.mxu0 0.0
    %1857 = vmatpush1.msra.mxu0 0.0
    %1858 = vmatprep.subr.mxu0 0.0
    %1859 = vmatpush1.msra.mxu0 0.0
    %1860 = vmatprep.subr.mxu0 0.0
    %1861 = vmatpush1.msra.mxu0 0.0
    %1862 = vmatprep.subr.mxu0 0.0
    %1863 = vmatpush1.msra.mxu0 0.0
    %1864 = vmatprep.subr.mxu0 0.0
    %1865 = vmatpush1.msra.mxu0 0.0
    %1866 = vmatprep.subr.mxu0 0.0
    %1867 = vmatpush1.msra.mxu0 0.0
    %1868 = vmatprep.subr.mxu0 0.0
    %1869 = vmatpush1.msra.mxu0 0.0
    %1870 = vmatprep.subr.mxu0 0.0
    %1871 = vmatpush1.msra.mxu0 0.0
    %1872 = vmatprep.subr.mxu0 0.0
    %1873 = vmatpush1.msra.mxu0 0.0
    %1874 = vmatprep.subr.mxu0 0.0
    %1875 = vmatpush1.msra.mxu0 0.0
    %1876 = vmatprep.mubr.f32.mxu0 0.0
    %v1877 = vand.u32 %v1218, 4294901760
    %1878 = vmatmul.mubr.f32.gmra.mrb[0].mxu0 %v1877
    %v1879 = vpop.f32.mrb[0].mxu0
    %v1880 = vadd.f32 %v1793, %v1879
    %v1881 = vpop.f32.mrb[0].mxu0
    %1882 = vdwg.mxu0
    %1883 = vst [vmem:[#allocation10] sm:$0xff] %v1880
    // Predicated region
    $region46: #{tpu_custom_call.1} parent=1 // pred_check
      _
    $region47: #{tpu_custom_call.1} parent=1 // pred_check_branch
      %1885 = sbr.rel (0) target = $region49
    $region48: #{tpu_custom_call.1} parent=1 // pred_region
      %s1887 = ssub.s32 128, 128
      %1888 = vsyncadd [#allocation4], %s1887
      %s1890 = sshll.u32 [#allocation10], 4
      %s1891 = int_to_ptr.vmem [resolvable:$true] %s1890
      %1893 = dma.vmem_to_hbm [thread:$0]  %s1891, 128, %s7, [#allocation4]
    $region49: #{tpu_custom_call.1} parent=1 // pred_fallthru
      _
    // Predicated region
    $region50: #{tpu_custom_call.1} parent=1 // pred_check
      _
    $region51: #{tpu_custom_call.1} parent=1 // pred_check_branch
      %1895 = sbr.rel (0) target = $region53
    $region52: #{tpu_custom_call.1} parent=1 // pred_region
      %1896 = dma.done [#allocation4], 128
    $region53: #{tpu_custom_call.1} parent=1 // pred_fallthru
      _
    %1897 = vsyncpa [#allocation3], 1
    %1898 = vsyncpa [#allocation6], 1
    %1899 = vsyncpa [#allocation9], 1
    %1900 = vsyncpa [#allocation4], 1

</llo_original>
